<compile_context>
chip_gen: v7x
topology: tpu7x:2x2x1
jax: 0.10.0
libtpu: 0.0.40
codegen_flags: <defaults>
</compile_context>

<pallas_src>
import jax
import jax.numpy as jnp
from jax.experimental import pallas as pl
from jax.experimental.pallas import tpu as pltpu

INPUT = 100
HIDDEN = 512
NUM_LAYERS = 5
GATES = 4 * HIDDEN
BN_EPS = 1e-5


# ---------------------------------------------------------------------------
# Shared LSTM cell math (used by both the Pallas kernel trace and the reference).
# Kernel gate order along the 4H axis: [i, f, o, g]  (PyTorch stores [i, f, g, o];
# weights are permuted once at parameter-pack time, see _to_kernel_gate_order).
# ---------------------------------------------------------------------------
def _lstm_cell(gates, c_prev):
    H = c_prev.shape[-1]
    ifo = jax.nn.sigmoid(gates[:, :3 * H])        # one contiguous sigmoid region
    g_g = jnp.tanh(gates[:, 3 * H:])
    i_g = ifo[:, 0 * H:1 * H]
    f_g = ifo[:, 1 * H:2 * H]
    o_g = ifo[:, 2 * H:3 * H]
    c_new = f_g * c_prev + i_g * g_g
    h_new = o_g * jnp.tanh(c_new)
    return h_new, c_new


def _to_kernel_gate_order(w):
    """(... , 4H) in PyTorch order [i,f,g,o] -> kernel order [i,f,o,g]."""
    i, f, g, o = jnp.split(w, 4, axis=-1)
    return jnp.concatenate([i, f, o, g], axis=-1)


# ---------------------------------------------------------------------------
# Kernel 1: hoisted layer-0 input projection  x_flat @ Wih0 + b0  (M-tiled matmul).
# ---------------------------------------------------------------------------
def input_proj_kernel(x_ref, w_ref, b_ref, out_ref):
    out_ref[...] = (jnp.dot(x_ref[...].astype(jnp.bfloat16), w_ref[...],
                            preferred_element_type=jnp.float32)
                    + b_ref[...])


def run_input_proj(x_flat, w_ih0_bf16, b0):
    M, Din = x_flat.shape
    tile_m = 512 if (M > 512 and M % 512 == 0) else M
    return pl.pallas_call(
        input_proj_kernel,
        out_shape=jax.ShapeDtypeStruct((M, GATES), jnp.float32),
        grid_spec=pltpu.PrefetchScalarGridSpec(
            num_scalar_prefetch=0,
            grid=(M // tile_m,),
            in_specs=[pl.BlockSpec((tile_m, Din), lambda m: (m, 0)),
                      pl.BlockSpec((Din, GATES), lambda m: (0, 0)),
                      pl.BlockSpec((1, GATES), lambda m: (0, 0))],
            out_specs=pl.BlockSpec((tile_m, GATES), lambda m: (m, 0)),
        ),
        compiler_params=pltpu.CompilerParams(
            dimension_semantics=("parallel",)),
    )(x_flat, w_ih0_bf16, b0)


# ---------------------------------------------------------------------------
# Kernel 2: fused 5-layer LSTM recurrence + FC/BN/ReLU head.
#   grid=(T,), all recurrent weights + FC params resident in VMEM, h (bf16) / c (f32)
#   in VMEM scratch, head runs under pl.when(t == T-1), output is the final (B, 2).
# ---------------------------------------------------------------------------
def fused_lstm_fc_kernel(*refs):
    (xp_ref, whh0_ref,                                    # (1,B,4H) f32 | (H,4H) bf16
     w1_ref, w2_ref, w3_ref, w4_ref,                      # (2H,4H) bf16 each: [Wih; Whh]
     b1_ref, b2_ref, b3_ref, b4_ref,                      # (1,4H) f32
     fw1_ref, fb1_ref, g1_ref, be1_ref,                   # FC head params
     fw2_ref, fb2_ref, g2_ref, be2_ref,
     fw3_ref, fb3_ref, g3_ref, be3_ref,
     fw4_ref, fb4_ref,
     out_ref,                                             # (B, 2) f32
     hbf_scr,                                             # (L, B, 2H) bf16: [h_in(t) | h_own(t-1)]
     c_scr) = refs                                        # (L, B, H)  f32

    t = pl.program_id(0)
    H = HIDDEN

    @pl.when(t == 0)
    def _init():
        hbf_scr[...] = jnp.zeros_like(hbf_scr)
        c_scr[...] = jnp.zeros_like(c_scr)

    # ---- layer 0: x-projection hoisted; only h(t-1) @ Whh remains per step.
    gates0 = xp_ref[0] + jnp.dot(hbf_scr[0, :, H:], whh0_ref[...],
                                 preferred_element_type=jnp.float32)
    h, c = _lstm_cell(gates0, c_scr[0])
    c_scr[0] = c
    h_bf = h.astype(jnp.bfloat16)
    hbf_scr[0, :, H:] = h_bf            # own history for next step
    hbf_scr[1, :, :H] = h_bf            # input half of layer 1 at this step

    # ---- layers 1..4: one fused [h_lower(t) | h_own(t-1)] @ [Wih; Whh] MXU pass each.
    w_refs = (w1_ref, w2_ref, w3_ref, w4_ref)
    b_refs = (b1_ref, b2_ref, b3_ref, b4_ref)
    for layer in range(1, NUM_LAYERS):
        gates = (jnp.dot(hbf_scr[layer], w_refs[layer - 1][...],
                         preferred_element_type=jnp.float32)
                 + b_refs[layer - 1][...])
        h, c = _lstm_cell(gates, c_scr[layer])
        c_scr[layer] = c
        h_bf = h.astype(jnp.bfloat16)
        hbf_scr[layer, :, H:] = h_bf
        if layer + 1 < NUM_LAYERS:
            hbf_scr[layer + 1, :, :H] = h_bf

    # ---- FC head (Linear -> BN(batch stats) -> ReLU x3, Linear) fused at the last step.
    @pl.when(t == pl.num_programs(0) - 1)
    def _head():
        def lin(y, w_ref, b_ref):
            return (jnp.dot(y.astype(jnp.bfloat16), w_ref[...],
                            preferred_element_type=jnp.float32) + b_ref[...])

        def bn_relu(y, gamma_ref, beta_ref):
            mean = jnp.mean(y, axis=0, keepdims=True)
            var = jnp.mean((y - mean) ** 2, axis=0, keepdims=True)   # biased var (train-mode BN)
            y = (y - mean) * jax.lax.rsqrt(var + BN_EPS) * gamma_ref[...] + beta_ref[...]
            return jnp.maximum(y, 0.0)

        y = bn_relu(lin(h, fw1_ref, fb1_ref), g1_ref, be1_ref)       # h = top-layer f32 h(T-1)
        y = bn_relu(lin(y, fw2_ref, fb2_ref), g2_ref, be2_ref)
        y = bn_relu(lin(y, fw3_ref, fb3_ref), g3_ref, be3_ref)
        out_ref[...] = lin(y, fw4_ref, fb4_ref)


def _fused_call(xproj_tm, whh0, wcats, lstm_biases, fc_params, single_buffer_weights):
    T, B, G = xproj_tm.shape
    H = G // 4

    if single_buffer_weights:
        # Constant index_map -> second pipeline buffer is pure VMEM waste; single-buffer it.
        def const_spec(shape):
            return pl.BlockSpec(shape, lambda t: (0, 0), pipeline_mode=pl.Buffered(1))
        vmem_limit = 32 * 1024 * 1024      # ~18 MiB bf16 weights resident -> comfortable on v7x
    else:
        def const_spec(shape):
            return pl.BlockSpec(shape, lambda t: (0, 0))
        vmem_limit = 48 * 1024 * 1024      # double-buffered bf16 weights (~36 MiB)

    in_specs = ([pl.BlockSpec((1, B, G), lambda t: (t, 0, 0))]       # per-step x-projection
                + [const_spec(whh0.shape)]
                + [const_spec(w.shape) for w in wcats]
                + [const_spec(b.shape) for b in lstm_biases]
                + [const_spec(p.shape) for p in fc_params])

    return pl.pallas_call(
        fused_lstm_fc_kernel,
        out_shape=jax.ShapeDtypeStruct((B, 2), jnp.float32),
        grid_spec=pltpu.PrefetchScalarGridSpec(
            num_scalar_prefetch=0,
            grid=(T,),
            in_specs=in_specs,
            out_specs=pl.BlockSpec((B, 2), lambda t: (0, 0)),
            scratch_shapes=[
                pltpu.VMEM((NUM_LAYERS, B, 2 * H), jnp.bfloat16),    # [h_in(t) | h_own(t-1)]
                pltpu.VMEM((NUM_LAYERS, B, H), jnp.float32),         # cell state c (f32)
            ],
        ),
        compiler_params=pltpu.CompilerParams(
            # h/c carried across the time axis -> must stay sequential.
            dimension_semantics=("arbitrary",),
            vmem_limit_bytes=vmem_limit,
        ),
    )(xproj_tm, whh0, *wcats, *lstm_biases, *fc_params)


def run_fused_lstm_fc(xproj_tm, whh0, wcats, lstm_biases, fc_params):
    try:
        return _fused_call(xproj_tm, whh0, wcats, lstm_biases, fc_params, True)
    except Exception:
        # pl.Buffered(1) unsupported in this runtime -> fall back to default double-buffering.
        return _fused_call(xproj_tm, whh0, wcats, lstm_biases, fc_params, False)


# ---------------------------------------------------------------------------
# Full forward (thin JAX glue).
# ---------------------------------------------------------------------------
def lstm_layer5_forward(x, proj_params, lstm_params, fc_params):
    B, T, _ = x.shape
    w_ih0, b0 = proj_params
    whh0, wcats, lstm_biases = lstm_params

    x_tm = jnp.transpose(x, (1, 0, 2))                               # (T, B, Din) time-major
    xproj = run_input_proj(x_tm.reshape(T * B, INPUT), w_ih0, b0)
    xproj = xproj.reshape(T, B, GATES)
    return run_fused_lstm_fc(xproj, whh0, wcats, lstm_biases, fc_params)


# ---------------------------------------------------------------------------
# Pure-JAX reference of the stacked LSTM + Linear/BN/ReLU head.  It mirrors the
# kernel's mixed precision exactly (bf16 matmul inputs, f32 accumulation, f32 cell
# state / elementwise), so the check isolates Pallas implementation correctness.
# ---------------------------------------------------------------------------
def reference_forward(x, proj_params, lstm_params, fc_params):
    B, T, _ = x.shape
    w_ih0, b0 = proj_params
    whh0, wcats, lstm_biases = lstm_params

    def mm(a, b):
        return jnp.dot(a.astype(jnp.bfloat16), b, preferred_element_type=jnp.float32)

    x_tm = jnp.transpose(x, (1, 0, 2))

    # layer 0
    h = jnp.zeros((B, HIDDEN), jnp.float32)
    c = jnp.zeros((B, HIDDEN), jnp.float32)
    h_seq = []
    for t in range(T):
        gates = (mm(x_tm[t], w_ih0) + b0) + mm(h, whh0)
        h, c = _lstm_cell(gates, c)
        h_seq.append(h)

    # layers 1..4
    for layer in range(1, NUM_LAYERS):
        h = jnp.zeros((B, HIDDEN), jnp.float32)
        c = jnp.zeros((B, HIDDEN), jnp.float32)
        new_seq = []
        for t in range(T):
            inp = jnp.concatenate([h_seq[t], h], axis=1)
            gates = mm(inp, wcats[layer - 1]) + lstm_biases[layer - 1]
            h, c = _lstm_cell(gates, c)
            new_seq.append(h)
        h_seq = new_seq

    y = h_seq[-1]
    (fw1, fb1, g1, be1, fw2, fb2, g2, be2, fw3, fb3, g3, be3, fw4, fb4) = fc_params

    def bn_relu(y, g, be):
        mean = jnp.mean(y, axis=0, keepdims=True)
        var = jnp.mean((y - mean) ** 2, axis=0, keepdims=True)
        return jnp.maximum((y - mean) * jax.lax.rsqrt(var + BN_EPS) * g + be, 0.0)

    y = bn_relu(mm(y, fw1) + fb1, g1, be1)
    y = bn_relu(mm(y, fw2) + fb2, g2, be2)
    y = bn_relu(mm(y, fw3) + fb3, g3, be3)
    return mm(y, fw4) + fb4


# ---------------------------------------------------------------------------
# Deterministic parameter init (PyTorch-style uniform ranges), stored in kernel layout.
# ---------------------------------------------------------------------------
def init_params(key):
    keys = iter(jax.random.split(key, 64))

    def unif(shape, k):
        return jax.random.uniform(next(keys), shape, jnp.float32, -k, k)

    k_lstm = 1.0 / jnp.sqrt(HIDDEN)

    # Layer 0: Wih kept separate (hoisted projection), Whh resident in the recurrence.
    w_ih0 = _to_kernel_gate_order(unif((GATES, INPUT), k_lstm).T)            # (100, 2048)
    w_hh0 = _to_kernel_gate_order(unif((GATES, HIDDEN), k_lstm).T)           # (512, 2048)
    b0 = _to_kernel_gate_order(
        (unif((GATES,), k_lstm) + unif((GATES,), k_lstm)).reshape(1, GATES))  # b_ih + b_hh
    proj_params = (w_ih0.astype(jnp.bfloat16), b0)

    # Layers 1..4: pre-concatenated [Wih^T; Whh^T] -> one fused matmul per step.
    wcats, lstm_biases = [], []
    for _ in range(1, NUM_LAYERS):
        w_ih = _to_kernel_gate_order(unif((GATES, HIDDEN), k_lstm).T)        # (512, 2048)
        w_hh = _to_kernel_gate_order(unif((GATES, HIDDEN), k_lstm).T)        # (512, 2048)
        b = _to_kernel_gate_order(
            (unif((GATES,), k_lstm) + unif((GATES,), k_lstm)).reshape(1, GATES))
        wcats.append(jnp.concatenate([w_ih, w_hh], axis=0).astype(jnp.bfloat16))  # (1024, 2048)
        lstm_biases.append(b)
    lstm_params = (w_hh0.astype(jnp.bfloat16), tuple(wcats), tuple(lstm_biases))

    # FC head: Linear(512,128) BN ReLU / Linear(128,32) BN ReLU / Linear(32,16) BN ReLU / Linear(16,2)
    def linear(din, dout):
        k = 1.0 / jnp.sqrt(din)
        w = unif((dout, din), k).T.astype(jnp.bfloat16)                      # (Din, Dout) bf16
        b = unif((dout,), k).reshape(1, dout)
        return w, b

    def bn(dim):
        return jnp.ones((1, dim), jnp.float32), jnp.zeros((1, dim), jnp.float32)

    w1, b1 = linear(512, 128); g1, be1 = bn(128)
    w2, b2 = linear(128, 32);  g2, be2 = bn(32)
    w3, b3 = linear(32, 16);   g3, be3 = bn(16)
    w4, b4 = linear(16, 2)
    fc_params = (w1, b1, g1, be1, w2, b2, g2, be2, w3, b3, g3, be3, w4, b4)
    return proj_params, lstm_params, fc_params


if __name__ == "__main__":
    B, T = 8, 8   # B=8 fills the f32 sublane tile; pack/pad larger batches for best MXU use.
    key = jax.random.PRNGKey(0)
    k_x, k_p = jax.random.split(key)
    x = jax.random.normal(k_x, (B, T, INPUT), jnp.float32)
    proj_params, lstm_params, fc_params = init_params(k_p)

    out = jax.block_until_ready(lstm_layer5_forward(x, proj_params, lstm_params, fc_params))
    ref = jax.block_until_ready(reference_forward(x, proj_params, lstm_params, fc_params))

    assert out.shape == (B, 2), out.shape
    assert jnp.all(jnp.isfinite(out))
    assert jnp.allclose(out, ref, rtol=2e-2, atol=2e-2), (out, ref)

    print("KERNEL_OK")
</pallas_src>

<mosaic_0001>
module attributes {stable_mosaic.version = 11 : i64} {
  func.func @input_proj_kernel(%arg0: i32, %arg1: memref<64x100xf32, #tpu.memory_space<vmem>>, %arg2: memref<100x2048xbf16, #tpu.memory_space<vmem>>, %arg3: memref<1x2048xf32, #tpu.memory_space<vmem>>, %arg4: memref<64x2048xf32, #tpu.memory_space<vmem>>) attributes {dimension_semantics = [#tpu.dimension_semantics<parallel>], iteration_bounds = array<i64: 1>, scalar_prefetch = 0 : i64, scratch_operands = 0 : i64, tpu.core_type = #tpu.core_type<tc>, window_params = [{transform_indices = @transform_0, window_bounds = array<i64: 64, 100>}, {pipeline_mode = #tpu.pipeline_mode<synchronous>, transform_indices = @transform_1, window_bounds = array<i64: 100, 2048>}, {pipeline_mode = #tpu.pipeline_mode<synchronous>, transform_indices = @transform_2, window_bounds = array<i64: 1, 2048>}, {transform_indices = @transform_3, window_bounds = array<i64: 64, 2048>}]} {
    %c0 = arith.constant 0 : index
    %c0_0 = arith.constant 0 : index
    %0 = vector.load %arg1[%c0, %c0_0] : memref<64x100xf32, #tpu.memory_space<vmem>>, vector<64x100xf32>
    %1 = arith.truncf %0 : vector<64x100xf32> to vector<64x100xbf16>
    %c0_1 = arith.constant 0 : index
    %c0_2 = arith.constant 0 : index
    %2 = vector.load %arg2[%c0_1, %c0_2] : memref<100x2048xbf16, #tpu.memory_space<vmem>>, vector<100x2048xbf16>
    %cst = arith.constant dense<0.000000e+00> : vector<64x2048xf32>
    %3 = tpu.matmul %1, %2, %cst {dimension_numbers = #tpu.dot_dimension_numbers<[1], [0], [0], [1], [0, 0, 1, 1], [], []>} : vector<64x100xbf16>, vector<100x2048xbf16>, vector<64x2048xf32> -> vector<64x2048xf32>
    %c0_3 = arith.constant 0 : index
    %c0_4 = arith.constant 0 : index
    %4 = vector.load %arg3[%c0_3, %c0_4] : memref<1x2048xf32, #tpu.memory_space<vmem>>, vector<1x2048xf32>
    %5 = vector.broadcast %4 : vector<1x2048xf32> to vector<64x2048xf32>
    %6 = arith.addf %3, %5 : vector<64x2048xf32>
    %c0_5 = arith.constant 0 : index
    %c0_6 = arith.constant 0 : index
    %7 = vector.load %arg4[%c0_5, %c0_6] : memref<64x2048xf32, #tpu.memory_space<vmem>>, vector<64x2048xf32>
    tpu.vector_store %arg4[%c0_5, %c0_6], %6 {strides = array<i32>} : memref<64x2048xf32, #tpu.memory_space<vmem>>, vector<64x2048xf32>,
    return
  }
  func.func @transform_0(%arg0: i32) -> (i32, i32) {
    %c0_i32 = arith.constant 0 : i32
    %c0_i32_0 = arith.constant 0 : i32
    return %arg0, %c0_i32 : i32, i32
  }
  func.func @transform_1(%arg0: i32) -> (i32, i32) {
    %c0_i32 = arith.constant 0 : i32
    %c0_i32_0 = arith.constant 0 : i32
    %c0_i32_1 = arith.constant 0 : i32
    return %c0_i32, %c0_i32_0 : i32, i32
  }
  func.func @transform_2(%arg0: i32) -> (i32, i32) {
    %c0_i32 = arith.constant 0 : i32
    %c0_i32_0 = arith.constant 0 : i32
    %c0_i32_1 = arith.constant 0 : i32
    return %c0_i32, %c0_i32_0 : i32, i32
  }
  func.func @transform_3(%arg0: i32) -> (i32, i32) {
    %c0_i32 = arith.constant 0 : i32
    %c0_i32_0 = arith.constant 0 : i32
    return %arg0, %c0_i32 : i32, i32
  }
}

</mosaic_0001>

<llo_original>
// kernel: tpu_custom_call.1
$region0: #{tpu_custom_call.1}
  #allocation0 [shape = 'u32[]', space=smem, size = 0x4, offset = 0x4, fixed_abs, tag = 'smem constant byte address 0x4 - core index']
  #allocation1 [shape = 'u32[144,128]{1,0:T(1,128)}', space=vmem, size = 0x12000, scoped, tag = 'internal scratch']
  %s0 = inlined_call_operand.hbm [shape: f32[64,100], index: 0, kind: input, shape index: {}]
  %s1 = inlined_call_operand.hbm [shape: bf16[100,2048], index: 1, kind: input, shape index: {}]
  %s2 = inlined_call_operand.hbm [shape: f32[1,2048], index: 2, kind: input, shape index: {}]
  %s3 = inlined_call_operand.hbm [shape: f32[64,2048], index: 3, kind: output, shape index: {}]
  %s4 = sld [smem:[#allocation0]]
  $region34: #{tpu_custom_call.1} parent=0
    _
  %s6 = ssub.s32 1, %s4
  %s7 = scalar_select 0, %s6, %s4
  $region1: #{tpu_custom_call.1} parent=0
    #allocation2 [shape = 'u8[32768]{0}', space=vmem, size = 0x8000, scoped, tag = 'input window, operand 0, single buffered']
    #allocation3 [shape = 's32[1]{0}', space=sflag, size = 0x4, scoped, tag = 'scoped memory for tpu_custom_call.1']
    #allocation4 [shape = 's32[1]{0}', space=sflag, size = 0x4, scoped, tag = 'scoped memory for tpu_custom_call.1']
    #allocation5 [shape = 'u8[425984]{0}', space=vmem, size = 0x68000, scoped, tag = 'input window, operand 1, single buffered']
    #allocation6 [shape = 's32[1]{0}', space=sflag, size = 0x4, scoped, tag = 'scoped memory for tpu_custom_call.1']
    #allocation7 [shape = 'u8[8192]{0}', space=vmem, size = 0x2000, scoped, tag = 'input window, operand 2, single buffered']
    #allocation8 [shape = 'u8[524288]{0}', space=vmem, size = 0x80000, scoped, tag = 'output window, operand 0, single buffered']
    %8 = vsyncpa [#allocation3], 0
    %9 = vsyncpa [#allocation6], 0
    %10 = vsyncpa [#allocation4], 0
    // Predicated region
    $region2: #{tpu_custom_call.1} parent=1 // pred_check
      _
    $region3: #{tpu_custom_call.1} parent=1 // pred_check_branch
      %12 = sbr.rel (0) target = $region5
    $region4: #{tpu_custom_call.1} parent=1 // pred_region
      %s14 = ssub.s32 1024, 1024
      %15 = vsyncadd [#allocation3], %s14
      %s16 = sshll.u32 [#allocation2], 4
      %s17 = int_to_ptr.vmem [resolvable:$true] %s16
      %22 = dma.hbm_to_vmem [thread:$0]  %s0, 1024, %s17, [#allocation3], 128, 128, 8
    $region5: #{tpu_custom_call.1} parent=1 // pred_fallthru
      _
    // Predicated region
    $region6: #{tpu_custom_call.1} parent=1 // pred_check
      _
    $region7: #{tpu_custom_call.1} parent=1 // pred_check_branch
      %24 = sbr.rel (0) target = $region9
    $region8: #{tpu_custom_call.1} parent=1 // pred_region
      %s26 = ssub.s32 13312, 13312
      %27 = vsyncadd [#allocation6], %s26
      %s28 = sshll.u32 [#allocation5], 4
      %s29 = int_to_ptr.vmem [resolvable:$true] %s28
      %34 = dma.hbm_to_vmem [thread:$0]  %s1, 13312, %s29, [#allocation6], 1024, 1024, 64
    $region9: #{tpu_custom_call.1} parent=1 // pred_fallthru
      _
    // Predicated region
    $region10: #{tpu_custom_call.1} parent=1 // pred_check
      _
    $region11: #{tpu_custom_call.1} parent=1 // pred_check_branch
      %36 = sbr.rel (0) target = $region13
    $region12: #{tpu_custom_call.1} parent=1 // pred_region
      %s38 = ssub.s32 256, 256
      %39 = vsyncadd [#allocation6], %s38
      %s41 = sshll.u32 [#allocation7], 4
      %s42 = int_to_ptr.vmem [resolvable:$true] %s41
      %44 = dma.hbm_to_vmem [thread:$0]  %s2, 256, %s42, [#allocation6]
    $region13: #{tpu_custom_call.1} parent=1 // pred_fallthru
      _
    // Predicated region
    $region14: #{tpu_custom_call.1} parent=1 // pred_check
      _
    $region15: #{tpu_custom_call.1} parent=1 // pred_check_branch
      %46 = sbr.rel (0) target = $region17
    $region16: #{tpu_custom_call.1} parent=1 // pred_region
      %47 = dma.done [#allocation3], 1024
    $region17: #{tpu_custom_call.1} parent=1 // pred_fallthru
      _
    // Predicated region
    $region18: #{tpu_custom_call.1} parent=1 // pred_check
      _
    $region19: #{tpu_custom_call.1} parent=1 // pred_check_branch
      %49 = sbr.rel (0) target = $region21
    $region20: #{tpu_custom_call.1} parent=1 // pred_region
      %50 = dma.done [#allocation6], 13312
    $region21: #{tpu_custom_call.1} parent=1 // pred_fallthru
      _
    // Predicated region
    $region22: #{tpu_custom_call.1} parent=1 // pred_check
      _
    $region23: #{tpu_custom_call.1} parent=1 // pred_check_branch
      %52 = sbr.rel (0) target = $region25
    $region24: #{tpu_custom_call.1} parent=1 // pred_region
      %53 = dma.done [#allocation6], 256
    $region25: #{tpu_custom_call.1} parent=1 // pred_fallthru
      _
    %v55 = vld [vmem:[#allocation2] sm:$0xff]
    %v56 = vld [vmem:[#allocation2 + $0x8] sm:$0xff]
    %v57 = vld [vmem:[#allocation2 + $0x10] sm:$0xff]
    %v58 = vld [vmem:[#allocation2 + $0x18] sm:$0xff]
    %v59 = vld [vmem:[#allocation2 + $0x20] sm:$0xff]
    %v60 = vld [vmem:[#allocation2 + $0x28] sm:$0xff]
    %v61 = vld [vmem:[#allocation2 + $0x30] sm:$0xff]
    %v62 = vld [vmem:[#allocation2 + $0x38] sm:$0xff]
    %v63 = vpack.c.bf16 %v56, %v55
    %v64 = vpack.c.bf16 %v58, %v57
    %v65 = vpack.c.bf16 %v60, %v59
    %v66 = vpack.c.bf16 %v62, %v61
    %v67 = vld [vmem:[#allocation5] sm:$0xff]
    %v68 = vld [vmem:[#allocation5 + $0x8] sm:$0xff]
    %v69 = vld [vmem:[#allocation5 + $0x10] sm:$0xff]
    %v70 = vld [vmem:[#allocation5 + $0x18] sm:$0xff]
    %v71 = vld [vmem:[#allocation5 + $0x20] sm:$0xff]
    %v72 = vld [vmem:[#allocation5 + $0x28] sm:$0xff]
    %v73 = vld [vmem:[#allocation5 + $0x30] sm:$0xff]
    %v74 = vld [vmem:[#allocation5 + $0x38] sm:$0xff]
    %v75 = vld [vmem:[#allocation5 + $0x40] sm:$0xff]
    %v76 = vld [vmem:[#allocation5 + $0x48] sm:$0xff]
    %v77 = vld [vmem:[#allocation5 + $0x50] sm:$0xff]
    %v78 = vld [vmem:[#allocation5 + $0x58] sm:$0xff]
    %v79 = vld [vmem:[#allocation5 + $0x60] sm:$0xff]
    %v80 = vld [vmem:[#allocation5 + $0x68] sm:$0xff]
    %v81 = vld [vmem:[#allocation5 + $0x70] sm:$0xff]
    %v82 = vld [vmem:[#allocation5 + $0x78] sm:$0xff]
    %v83 = vld [vmem:[#allocation5 + $0x80] sm:$0xff]
    %v84 = vld [vmem:[#allocation5 + $0x88] sm:$0xff]
    %v85 = vld [vmem:[#allocation5 + $0x90] sm:$0xff]
    %v86 = vld [vmem:[#allocation5 + $0x98] sm:$0xff]
    %v87 = vld [vmem:[#allocation5 + $0xa0] sm:$0xff]
    %v88 = vld [vmem:[#allocation5 + $0xa8] sm:$0xff]
    %v89 = vld [vmem:[#allocation5 + $0xb0] sm:$0xff]
    %v90 = vld [vmem:[#allocation5 + $0xb8] sm:$0xff]
    %v91 = vld [vmem:[#allocation5 + $0xc0] sm:$0xff]
    %v92 = vld [vmem:[#allocation5 + $0xc8] sm:$0xff]
    %v93 = vld [vmem:[#allocation5 + $0xd0] sm:$0xff]
    %v94 = vld [vmem:[#allocation5 + $0xd8] sm:$0xff]
    %v95 = vld [vmem:[#allocation5 + $0xe0] sm:$0xff]
    %v96 = vld [vmem:[#allocation5 + $0xe8] sm:$0xff]
    %v97 = vld [vmem:[#allocation5 + $0xf0] sm:$0xff]
    %v98 = vld [vmem:[#allocation5 + $0xf8] sm:$0xff]
    %v99 = vld [vmem:[#allocation5 + $0x100] sm:$0xff]
    %v100 = vld [vmem:[#allocation5 + $0x108] sm:$0xff]
    %v101 = vld [vmem:[#allocation5 + $0x110] sm:$0xff]
    %v102 = vld [vmem:[#allocation5 + $0x118] sm:$0xff]
    %v103 = vld [vmem:[#allocation5 + $0x120] sm:$0xff]
    %v104 = vld [vmem:[#allocation5 + $0x128] sm:$0xff]
    %v105 = vld [vmem:[#allocation5 + $0x130] sm:$0xff]
    %v106 = vld [vmem:[#allocation5 + $0x138] sm:$0xff]
    %v107 = vld [vmem:[#allocation5 + $0x140] sm:$0xff]
    %v108 = vld [vmem:[#allocation5 + $0x148] sm:$0xff]
    %v109 = vld [vmem:[#allocation5 + $0x150] sm:$0xff]
    %v110 = vld [vmem:[#allocation5 + $0x158] sm:$0xff]
    %v111 = vld [vmem:[#allocation5 + $0x160] sm:$0xff]
    %v112 = vld [vmem:[#allocation5 + $0x168] sm:$0xff]
    %v113 = vld [vmem:[#allocation5 + $0x170] sm:$0xff]
    %v114 = vld [vmem:[#allocation5 + $0x178] sm:$0xff]
    %v115 = vld [vmem:[#allocation5 + $0x180] sm:$0xff]
    %v116 = vld [vmem:[#allocation5 + $0x188] sm:$0xff]
    %v117 = vld [vmem:[#allocation5 + $0x190] sm:$0xff]
    %v118 = vld [vmem:[#allocation5 + $0x198] sm:$0xff]
    %v119 = vld [vmem:[#allocation5 + $0x1a0] sm:$0xff]
    %v120 = vld [vmem:[#allocation5 + $0x1a8] sm:$0xff]
    %v121 = vld [vmem:[#allocation5 + $0x1b0] sm:$0xff]
    %v122 = vld [vmem:[#allocation5 + $0x1b8] sm:$0xff]
    %v123 = vld [vmem:[#allocation5 + $0x1c0] sm:$0xff]
    %v124 = vld [vmem:[#allocation5 + $0x1c8] sm:$0xff]
    %v125 = vld [vmem:[#allocation5 + $0x1d0] sm:$0xff]
    %v126 = vld [vmem:[#allocation5 + $0x1d8] sm:$0xff]
    %v127 = vld [vmem:[#allocation5 + $0x1e0] sm:$0xff]
    %v128 = vld [vmem:[#allocation5 + $0x1e8] sm:$0xff]
    %v129 = vld [vmem:[#allocation5 + $0x1f0] sm:$0xff]
    %v130 = vld [vmem:[#allocation5 + $0x1f8] sm:$0xff]
    %v131 = vld [vmem:[#allocation5 + $0x200] sm:$0xff]
    %v132 = vld [vmem:[#allocation5 + $0x208] sm:$0xff]
    %v133 = vld [vmem:[#allocation5 + $0x210] sm:$0xff]
    %v134 = vld [vmem:[#allocation5 + $0x218] sm:$0xff]
    %v135 = vld [vmem:[#allocation5 + $0x220] sm:$0xff]
    %v136 = vld [vmem:[#allocation5 + $0x228] sm:$0xff]
    %v137 = vld [vmem:[#allocation5 + $0x230] sm:$0xff]
    %v138 = vld [vmem:[#allocation5 + $0x238] sm:$0xff]
    %v139 = vld [vmem:[#allocation5 + $0x240] sm:$0xff]
    %v140 = vld [vmem:[#allocation5 + $0x248] sm:$0xff]
    %v141 = vld [vmem:[#allocation5 + $0x250] sm:$0xff]
    %v142 = vld [vmem:[#allocation5 + $0x258] sm:$0xff]
    %v143 = vld [vmem:[#allocation5 + $0x260] sm:$0xff]
    %v144 = vld [vmem:[#allocation5 + $0x268] sm:$0xff]
    %v145 = vld [vmem:[#allocation5 + $0x270] sm:$0xff]
    %v146 = vld [vmem:[#allocation5 + $0x278] sm:$0xff]
    %v147 = vld [vmem:[#allocation5 + $0x280] sm:$0xff]
    %v148 = vld [vmem:[#allocation5 + $0x288] sm:$0xff]
    %v149 = vld [vmem:[#allocation5 + $0x290] sm:$0xff]
    %v150 = vld [vmem:[#allocation5 + $0x298] sm:$0xff]
    %v151 = vld [vmem:[#allocation5 + $0x2a0] sm:$0xff]
    %v152 = vld [vmem:[#allocation5 + $0x2a8] sm:$0xff]
    %v153 = vld [vmem:[#allocation5 + $0x2b0] sm:$0xff]
    %v154 = vld [vmem:[#allocation5 + $0x2b8] sm:$0xff]
    %v155 = vld [vmem:[#allocation5 + $0x2c0] sm:$0xff]
    %v156 = vld [vmem:[#allocation5 + $0x2c8] sm:$0xff]
    %v157 = vld [vmem:[#allocation5 + $0x2d0] sm:$0xff]
    %v158 = vld [vmem:[#allocation5 + $0x2d8] sm:$0xff]
    %v159 = vld [vmem:[#allocation5 + $0x2e0] sm:$0xff]
    %v160 = vld [vmem:[#allocation5 + $0x2e8] sm:$0xff]
    %v161 = vld [vmem:[#allocation5 + $0x2f0] sm:$0xff]
    %v162 = vld [vmem:[#allocation5 + $0x2f8] sm:$0xff]
    %v163 = vld [vmem:[#allocation5 + $0x300] sm:$0x33]
    %v164 = vld [vmem:[#allocation5 + $0x308] sm:$0x33]
    %v165 = vld [vmem:[#allocation5 + $0x310] sm:$0x33]
    %v166 = vld [vmem:[#allocation5 + $0x318] sm:$0x33]
    %v167 = vld [vmem:[#allocation5 + $0x320] sm:$0x33]
    %v168 = vld [vmem:[#allocation5 + $0x328] sm:$0x33]
    %v169 = vld [vmem:[#allocation5 + $0x330] sm:$0x33]
    %v170 = vld [vmem:[#allocation5 + $0x338] sm:$0x33]
    %v171 = vld [vmem:[#allocation7] sm:$0xff]
    %v172 = vld [vmem:[#allocation7 + $0x8] sm:$0xff]
    %v175 = vlaneseq
    %v176 = vshrl.u32 %v175, 7
    %v177 = vsub.s32 0, %v176
    %v178 = vrot.slane %v171, %v177
    %v179 = vlaneseq
    %v180 = vshrl.u32 %v179, 7
    %v181 = vsub.s32 1, %v180
    %v182 = vrot.slane %v171, %v181
    %v183 = vlaneseq
    %v184 = vshrl.u32 %v183, 7
    %v185 = vsub.s32 2, %v184
    %v186 = vrot.slane %v171, %v185
    %v187 = vlaneseq
    %v188 = vshrl.u32 %v187, 7
    %v189 = vsub.s32 3, %v188
    %v190 = vrot.slane %v171, %v189
    %v191 = vlaneseq
    %v192 = vshrl.u32 %v191, 7
    %v193 = vsub.s32 4, %v192
    %v194 = vrot.slane %v171, %v193
    %v195 = vlaneseq
    %v196 = vshrl.u32 %v195, 7
    %v197 = vsub.s32 5, %v196
    %v198 = vrot.slane %v171, %v197
    %v199 = vlaneseq
    %v200 = vshrl.u32 %v199, 7
    %v201 = vsub.s32 6, %v200
    %v202 = vrot.slane %v171, %v201
    %v203 = vlaneseq
    %v204 = vshrl.u32 %v203, 7
    %v205 = vsub.s32 7, %v204
    %v206 = vrot.slane %v171, %v205
    %v207 = vlaneseq
    %v208 = vshrl.u32 %v207, 7
    %v209 = vsub.s32 0, %v208
    %v210 = vrot.slane %v172, %v209
    %v211 = vlaneseq
    %v212 = vshrl.u32 %v211, 7
    %v213 = vsub.s32 1, %v212
    %v214 = vrot.slane %v172, %v213
    %v215 = vlaneseq
    %v216 = vshrl.u32 %v215, 7
    %v217 = vsub.s32 2, %v216
    %v218 = vrot.slane %v172, %v217
    %v219 = vlaneseq
    %v220 = vshrl.u32 %v219, 7
    %v221 = vsub.s32 3, %v220
    %v222 = vrot.slane %v172, %v221
    %v223 = vlaneseq
    %v224 = vshrl.u32 %v223, 7
    %v225 = vsub.s32 4, %v224
    %v226 = vrot.slane %v172, %v225
    %v227 = vlaneseq
    %v228 = vshrl.u32 %v227, 7
    %v229 = vsub.s32 5, %v228
    %v230 = vrot.slane %v172, %v229
    %v231 = vlaneseq
    %v232 = vshrl.u32 %v231, 7
    %v233 = vsub.s32 6, %v232
    %v234 = vrot.slane %v172, %v233
    %v235 = vlaneseq
    %v236 = vshrl.u32 %v235, 7
    %v237 = vsub.s32 7, %v236
    %v238 = vrot.slane %v172, %v237
    %v359 = vunpack.c.l.b16 %v67
    %v360 = vunpack.c.h.b16 %v67
    %v361 = vunpack.c.l.b16 %v68
    %v362 = vunpack.c.h.b16 %v68
    %v363 = vunpack.c.l.b16 %v69
    %v364 = vunpack.c.h.b16 %v69
    %v365 = vunpack.c.l.b16 %v70
    %v366 = vunpack.c.h.b16 %v70
    %v367 = vunpack.c.l.b16 %v71
    %v368 = vunpack.c.h.b16 %v71
    %v369 = vunpack.c.l.b16 %v72
    %v370 = vunpack.c.h.b16 %v72
    %v371 = vunpack.c.l.b16 %v73
    %v372 = vunpack.c.h.b16 %v73
    %v373 = vunpack.c.l.b16 %v74
    %v374 = vunpack.c.h.b16 %v74
    %v375 = vunpack.c.l.b16 %v75
    %v376 = vunpack.c.h.b16 %v75
    %v377 = vunpack.c.l.b16 %v76
    %v378 = vunpack.c.h.b16 %v76
    %v379 = vunpack.c.l.b16 %v77
    %v380 = vunpack.c.h.b16 %v77
    %v381 = vunpack.c.l.b16 %v78
    %v382 = vunpack.c.h.b16 %v78
    %v383 = vunpack.c.l.b16 %v79
    %v384 = vunpack.c.h.b16 %v79
    %v385 = vunpack.c.l.b16 %v80
    %v386 = vunpack.c.h.b16 %v80
    %v387 = vunpack.c.l.b16 %v81
    %v388 = vunpack.c.h.b16 %v81
    %v389 = vunpack.c.l.b16 %v82
    %v390 = vunpack.c.h.b16 %v82
    %v391 = vunpack.c.l.b16 %v83
    %v392 = vunpack.c.h.b16 %v83
    %v393 = vunpack.c.l.b16 %v84
    %v394 = vunpack.c.h.b16 %v84
    %v395 = vunpack.c.l.b16 %v85
    %v396 = vunpack.c.h.b16 %v85
    %v397 = vunpack.c.l.b16 %v86
    %v398 = vunpack.c.h.b16 %v86
    %v399 = vunpack.c.l.b16 %v87
    %v400 = vunpack.c.h.b16 %v87
    %v401 = vunpack.c.l.b16 %v88
    %v402 = vunpack.c.h.b16 %v88
    %v403 = vunpack.c.l.b16 %v89
    %v404 = vunpack.c.h.b16 %v89
    %v405 = vunpack.c.l.b16 %v90
    %v406 = vunpack.c.h.b16 %v90
    %v407 = vunpack.c.l.b16 %v91
    %v408 = vunpack.c.h.b16 %v91
    %v409 = vunpack.c.l.b16 %v92
    %v410 = vunpack.c.h.b16 %v92
    %v411 = vunpack.c.l.b16 %v93
    %v412 = vunpack.c.h.b16 %v93
    %v413 = vunpack.c.l.b16 %v94
    %v414 = vunpack.c.h.b16 %v94
    %v415 = vunpack.c.l.b16 %v95
    %v416 = vunpack.c.h.b16 %v95
    %v417 = vunpack.c.l.b16 %v96
    %v418 = vunpack.c.h.b16 %v96
    %v419 = vunpack.c.l.b16 %v97
    %v420 = vunpack.c.h.b16 %v97
    %v421 = vunpack.c.l.b16 %v98
    %v422 = vunpack.c.h.b16 %v98
    %v423 = vunpack.c.l.b16 %v99
    %v424 = vunpack.c.h.b16 %v99
    %v425 = vunpack.c.l.b16 %v100
    %v426 = vunpack.c.h.b16 %v100
    %v427 = vunpack.c.l.b16 %v101
    %v428 = vunpack.c.h.b16 %v101
    %v429 = vunpack.c.l.b16 %v102
    %v430 = vunpack.c.h.b16 %v102
    %v431 = vunpack.c.l.b16 %v103
    %v432 = vunpack.c.h.b16 %v103
    %v433 = vunpack.c.l.b16 %v104
    %v434 = vunpack.c.h.b16 %v104
    %v435 = vunpack.c.l.b16 %v105
    %v436 = vunpack.c.h.b16 %v105
    %v437 = vunpack.c.l.b16 %v106
    %v438 = vunpack.c.h.b16 %v106
    %v439 = vunpack.c.l.b16 %v107
    %v440 = vunpack.c.h.b16 %v107
    %v441 = vunpack.c.l.b16 %v108
    %v442 = vunpack.c.h.b16 %v108
    %v443 = vunpack.c.l.b16 %v109
    %v444 = vunpack.c.h.b16 %v109
    %v445 = vunpack.c.l.b16 %v110
    %v446 = vunpack.c.h.b16 %v110
    %v447 = vunpack.c.l.b16 %v111
    %v448 = vunpack.c.h.b16 %v111
    %v449 = vunpack.c.l.b16 %v112
    %v450 = vunpack.c.h.b16 %v112
    %v451 = vunpack.c.l.b16 %v113
    %v452 = vunpack.c.h.b16 %v113
    %v453 = vunpack.c.l.b16 %v114
    %v454 = vunpack.c.h.b16 %v114
    %v455 = vunpack.c.l.b16 %v115
    %v456 = vunpack.c.h.b16 %v115
    %v457 = vunpack.c.l.b16 %v116
    %v458 = vunpack.c.h.b16 %v116
    %v459 = vunpack.c.l.b16 %v117
    %v460 = vunpack.c.h.b16 %v117
    %v461 = vunpack.c.l.b16 %v118
    %v462 = vunpack.c.h.b16 %v118
    %v463 = vunpack.c.l.b16 %v119
    %v464 = vunpack.c.h.b16 %v119
    %v465 = vunpack.c.l.b16 %v120
    %v466 = vunpack.c.h.b16 %v120
    %v467 = vunpack.c.l.b16 %v121
    %v468 = vunpack.c.h.b16 %v121
    %v469 = vunpack.c.l.b16 %v122
    %v470 = vunpack.c.h.b16 %v122
    %v471 = vunpack.c.l.b16 %v123
    %v472 = vunpack.c.h.b16 %v123
    %v473 = vunpack.c.l.b16 %v124
    %v474 = vunpack.c.h.b16 %v124
    %v475 = vunpack.c.l.b16 %v125
    %v476 = vunpack.c.h.b16 %v125
    %v477 = vunpack.c.l.b16 %v126
    %v478 = vunpack.c.h.b16 %v126
    %v479 = vunpack.c.l.b16 %v127
    %v480 = vunpack.c.h.b16 %v127
    %v481 = vunpack.c.l.b16 %v128
    %v482 = vunpack.c.h.b16 %v128
    %v483 = vunpack.c.l.b16 %v129
    %v484 = vunpack.c.h.b16 %v129
    %v485 = vunpack.c.l.b16 %v130
    %v486 = vunpack.c.h.b16 %v130
    %v487 = vunpack.c.l.b16 %v131
    %v488 = vunpack.c.h.b16 %v131
    %v489 = vunpack.c.l.b16 %v132
    %v490 = vunpack.c.h.b16 %v132
    %v491 = vunpack.c.l.b16 %v133
    %v492 = vunpack.c.h.b16 %v133
    %v493 = vunpack.c.l.b16 %v134
    %v494 = vunpack.c.h.b16 %v134
    %v495 = vunpack.c.l.b16 %v135
    %v496 = vunpack.c.h.b16 %v135
    %v497 = vunpack.c.l.b16 %v136
    %v498 = vunpack.c.h.b16 %v136
    %v499 = vunpack.c.l.b16 %v137
    %v500 = vunpack.c.h.b16 %v137
    %v501 = vunpack.c.l.b16 %v138
    %v502 = vunpack.c.h.b16 %v138
    %v503 = vunpack.c.l.b16 %v139
    %v504 = vunpack.c.h.b16 %v139
    %v505 = vunpack.c.l.b16 %v140
    %v506 = vunpack.c.h.b16 %v140
    %v507 = vunpack.c.l.b16 %v141
    %v508 = vunpack.c.h.b16 %v141
    %v509 = vunpack.c.l.b16 %v142
    %v510 = vunpack.c.h.b16 %v142
    %v511 = vunpack.c.l.b16 %v143
    %v512 = vunpack.c.h.b16 %v143
    %v513 = vunpack.c.l.b16 %v144
    %v514 = vunpack.c.h.b16 %v144
    %v515 = vunpack.c.l.b16 %v145
    %v516 = vunpack.c.h.b16 %v145
    %v517 = vunpack.c.l.b16 %v146
    %v518 = vunpack.c.h.b16 %v146
    %v519 = vunpack.c.l.b16 %v147
    %v520 = vunpack.c.h.b16 %v147
    %v521 = vunpack.c.l.b16 %v148
    %v522 = vunpack.c.h.b16 %v148
    %v523 = vunpack.c.l.b16 %v149
    %v524 = vunpack.c.h.b16 %v149
    %v525 = vunpack.c.l.b16 %v150
    %v526 = vunpack.c.h.b16 %v150
    %v527 = vunpack.c.l.b16 %v151
    %v528 = vunpack.c.h.b16 %v151
    %v529 = vunpack.c.l.b16 %v152
    %v530 = vunpack.c.h.b16 %v152
    %v531 = vunpack.c.l.b16 %v153
    %v532 = vunpack.c.h.b16 %v153
    %v533 = vunpack.c.l.b16 %v154
    %v534 = vunpack.c.h.b16 %v154
    %v535 = vunpack.c.l.b16 %v155
    %v536 = vunpack.c.h.b16 %v155
    %v537 = vunpack.c.l.b16 %v156
    %v538 = vunpack.c.h.b16 %v156
    %v539 = vunpack.c.l.b16 %v157
    %v540 = vunpack.c.h.b16 %v157
    %v541 = vunpack.c.l.b16 %v158
    %v542 = vunpack.c.h.b16 %v158
    %v543 = vunpack.c.l.b16 %v159
    %v544 = vunpack.c.h.b16 %v159
    %v545 = vunpack.c.l.b16 %v160
    %v546 = vunpack.c.h.b16 %v160
    %v547 = vunpack.c.l.b16 %v161
    %v548 = vunpack.c.h.b16 %v161
    %v549 = vunpack.c.l.b16 %v162
    %v550 = vunpack.c.h.b16 %v162
    %v551 = vunpack.c.l.b16 %v163
    %v552 = vunpack.c.h.b16 %v163
    %v553 = vunpack.c.l.b16 %v164
    %v554 = vunpack.c.h.b16 %v164
    %v555 = vunpack.c.l.b16 %v165
    %v556 = vunpack.c.h.b16 %v165
    %v557 = vunpack.c.l.b16 %v166
    %v558 = vunpack.c.h.b16 %v166
    %v559 = vunpack.c.l.b16 %v167
    %v560 = vunpack.c.h.b16 %v167
    %v561 = vunpack.c.l.b16 %v168
    %v562 = vunpack.c.h.b16 %v168
    %v563 = vunpack.c.l.b16 %v169
    %v564 = vunpack.c.h.b16 %v169
    %v565 = vunpack.c.l.b16 %v170
    %v566 = vunpack.c.h.b16 %v170
    %v567 = vpack.c.b16 %v375, %v359
    %v568 = vpack.c.b16 %v376, %v360
    %v569 = vpack.c.b16 %v377, %v361
    %v570 = vpack.c.b16 %v378, %v362
    %v571 = vpack.c.b16 %v379, %v363
    %v572 = vpack.c.b16 %v380, %v364
    %v573 = vpack.c.b16 %v381, %v365
    %v574 = vpack.c.b16 %v382, %v366
    %v575 = vpack.c.b16 %v383, %v367
    %v576 = vpack.c.b16 %v384, %v368
    %v577 = vpack.c.b16 %v385, %v369
    %v578 = vpack.c.b16 %v386, %v370
    %v579 = vpack.c.b16 %v387, %v371
    %v580 = vpack.c.b16 %v388, %v372
    %v581 = vpack.c.b16 %v389, %v373
    %v582 = vpack.c.b16 %v390, %v374
    %v583 = vpack.c.b16 %v407, %v391
    %v584 = vpack.c.b16 %v408, %v392
    %v585 = vpack.c.b16 %v409, %v393
    %v586 = vpack.c.b16 %v410, %v394
    %v587 = vpack.c.b16 %v411, %v395
    %v588 = vpack.c.b16 %v412, %v396
    %v589 = vpack.c.b16 %v413, %v397
    %v590 = vpack.c.b16 %v414, %v398
    %v591 = vpack.c.b16 %v415, %v399
    %v592 = vpack.c.b16 %v416, %v400
    %v593 = vpack.c.b16 %v417, %v401
    %v594 = vpack.c.b16 %v418, %v402
    %v595 = vpack.c.b16 %v419, %v403
    %v596 = vpack.c.b16 %v420, %v404
    %v597 = vpack.c.b16 %v421, %v405
    %v598 = vpack.c.b16 %v422, %v406
    %v599 = vpack.c.b16 %v439, %v423
    %v600 = vpack.c.b16 %v440, %v424
    %v601 = vpack.c.b16 %v441, %v425
    %v602 = vpack.c.b16 %v442, %v426
    %v603 = vpack.c.b16 %v443, %v427
    %v604 = vpack.c.b16 %v444, %v428
    %v605 = vpack.c.b16 %v445, %v429
    %v606 = vpack.c.b16 %v446, %v430
    %v607 = vpack.c.b16 %v447, %v431
    %v608 = vpack.c.b16 %v448, %v432
    %v609 = vpack.c.b16 %v449, %v433
    %v610 = vpack.c.b16 %v450, %v434
    %v611 = vpack.c.b16 %v451, %v435
    %v612 = vpack.c.b16 %v452, %v436
    %v613 = vpack.c.b16 %v453, %v437
    %v614 = vpack.c.b16 %v454, %v438
    %v615 = vpack.c.b16 %v471, %v455
    %v616 = vpack.c.b16 %v472, %v456
    %v617 = vpack.c.b16 %v473, %v457
    %v618 = vpack.c.b16 %v474, %v458
    %v619 = vpack.c.b16 %v475, %v459
    %v620 = vpack.c.b16 %v476, %v460
    %v621 = vpack.c.b16 %v477, %v461
    %v622 = vpack.c.b16 %v478, %v462
    %v623 = vpack.c.b16 %v479, %v463
    %v624 = vpack.c.b16 %v480, %v464
    %v625 = vpack.c.b16 %v481, %v465
    %v626 = vpack.c.b16 %v482, %v466
    %v627 = vpack.c.b16 %v483, %v467
    %v628 = vpack.c.b16 %v484, %v468
    %v629 = vpack.c.b16 %v485, %v469
    %v630 = vpack.c.b16 %v486, %v470
    %v631 = vpack.c.b16 %v503, %v487
    %v632 = vpack.c.b16 %v504, %v488
    %v633 = vpack.c.b16 %v505, %v489
    %v634 = vpack.c.b16 %v506, %v490
    %v635 = vpack.c.b16 %v507, %v491
    %v636 = vpack.c.b16 %v508, %v492
    %v637 = vpack.c.b16 %v509, %v493
    %v638 = vpack.c.b16 %v510, %v494
    %v639 = vpack.c.b16 %v511, %v495
    %v640 = vpack.c.b16 %v512, %v496
    %v641 = vpack.c.b16 %v513, %v497
    %v642 = vpack.c.b16 %v514, %v498
    %v643 = vpack.c.b16 %v515, %v499
    %v644 = vpack.c.b16 %v516, %v500
    %v645 = vpack.c.b16 %v517, %v501
    %v646 = vpack.c.b16 %v518, %v502
    %v647 = vpack.c.b16 %v535, %v519
    %v648 = vpack.c.b16 %v536, %v520
    %v649 = vpack.c.b16 %v537, %v521
    %v650 = vpack.c.b16 %v538, %v522
    %v651 = vpack.c.b16 %v539, %v523
    %v652 = vpack.c.b16 %v540, %v524
    %v653 = vpack.c.b16 %v541, %v525
    %v654 = vpack.c.b16 %v542, %v526
    %v655 = vpack.c.b16 %v543, %v527
    %v656 = vpack.c.b16 %v544, %v528
    %v657 = vpack.c.b16 %v545, %v529
    %v658 = vpack.c.b16 %v546, %v530
    %v659 = vpack.c.b16 %v547, %v531
    %v660 = vpack.c.b16 %v548, %v532
    %v661 = vpack.c.b16 %v549, %v533
    %v662 = vpack.c.b16 %v550, %v534
    %v663 = vpack.c.b16 %v551, %v551
    %v664 = vpack.c.b16 %v552, %v552
    %v665 = vpack.c.b16 %v553, %v553
    %v666 = vpack.c.b16 %v554, %v554
    %v667 = vpack.c.b16 %v555, %v555
    %v668 = vpack.c.b16 %v556, %v556
    %v669 = vpack.c.b16 %v557, %v557
    %v670 = vpack.c.b16 %v558, %v558
    %v671 = vpack.c.b16 %v559, %v559
    %v672 = vpack.c.b16 %v560, %v560
    %v673 = vpack.c.b16 %v561, %v561
    %v674 = vpack.c.b16 %v562, %v562
    %v675 = vpack.c.b16 %v563, %v563
    %v676 = vpack.c.b16 %v564, %v564
    %v677 = vpack.c.b16 %v565, %v565
    %v678 = vpack.c.b16 %v566, %v566
    %vm775 = vcmask 818176
    %v777 = vsel %vm775, %v63, 0
    %v780 = vsel %vm775, %v64, 0
    %v783 = vsel %vm775, %v65, 0
    %v786 = vsel %vm775, %v66, 0
    %vm788 = vcmask 1041408
    %v790 = vsel %vm788, %v663, 0
    %v793 = vsel %vm788, %v664, 0
    %v796 = vsel %vm788, %v665, 0
    %v799 = vsel %vm788, %v666, 0
    %v802 = vsel %vm788, %v667, 0
    %v805 = vsel %vm788, %v668, 0
    %v808 = vsel %vm788, %v669, 0
    %v811 = vsel %vm788, %v670, 0
    %v814 = vsel %vm788, %v671, 0
    %v817 = vsel %vm788, %v672, 0
    %v820 = vsel %vm788, %v673, 0
    %v823 = vsel %vm788, %v674, 0
    %v826 = vsel %vm788, %v675, 0
    %v829 = vsel %vm788, %v676, 0
    %v832 = vsel %vm788, %v677, 0
    %v835 = vsel %vm788, %v678, 0
    %837 = vmatprep.subr.bf16.mxu0 %v568
    %838 = vmatpush1.bf16.msra.mxu0 %v567
    %839 = vmatprep.subr.bf16.mxu0 %v584
    %840 = vmatpush1.bf16.msra.mxu0 %v583
    %841 = vmatprep.subr.bf16.mxu0 %v600
    %842 = vmatpush1.bf16.msra.mxu0 %v599
    %843 = vmatprep.subr.bf16.mxu0 %v616
    %844 = vmatpush1.bf16.msra.mxu0 %v615
    %845 = vmatprep.subr.bf16.mxu0 %v632
    %846 = vmatpush1.bf16.msra.mxu0 %v631
    %847 = vmatprep.subr.bf16.mxu0 %v648
    %848 = vmatpush1.bf16.msra.mxu0 %v647
    %849 = vmatprep.subr.bf16.mxu0 %v793
    %850 = vmatpush1.bf16.msra.mxu0 %v790
    %851 = vmatprep.subr.bf16.mxu0 0
    %852 = vmatpush1.bf16.msra.mxu0 0
    %853 = vmatprep.subr.bf16.mxu0 0
    %854 = vmatpush1.bf16.msra.mxu0 0
    %855 = vmatprep.subr.bf16.mxu0 0
    %856 = vmatpush1.bf16.msra.mxu0 0
    %857 = vmatprep.subr.bf16.mxu0 0
    %858 = vmatpush1.bf16.msra.mxu0 0
    %859 = vmatprep.subr.bf16.mxu0 0
    %860 = vmatpush1.bf16.msra.mxu0 0
    %861 = vmatprep.subr.bf16.mxu0 0
    %862 = vmatpush1.bf16.msra.mxu0 0
    %863 = vmatprep.subr.bf16.mxu0 0
    %864 = vmatpush1.bf16.msra.mxu0 0
    %865 = vmatprep.subr.bf16.mxu0 0
    %866 = vmatpush1.bf16.msra.mxu0 0
    %867 = vmatprep.subr.bf16.mxu0 0
    %868 = vmatpush1.bf16.msra.mxu0 0
    %869 = vmatprep.mubr.bf16.mxu0 0
    %870 = vmatmul.mubr.bf16.gmra.mrb[0].mxu0 %v777
    %v871 = vpop.f32.mrb[0].mxu0
    %v872 = vadd.f32 %v178, %v871
    %v873 = vpop.f32.mrb[0].mxu0
    %v874 = vadd.f32 %v182, %v873
    %v875 = vpop.f32.mrb[0].mxu0
    %v876 = vadd.f32 %v178, %v875
    %v877 = vpop.f32.mrb[0].mxu0
    %v878 = vadd.f32 %v182, %v877
    %879 = vmatprep.mubr.bf16.mxu0 0
    %880 = vmatmul.mubr.bf16.gmra.mrb[0].mxu0 %v780
    %v881 = vpop.f32.mrb[0].mxu0
    %v882 = vadd.f32 %v178, %v881
    %v883 = vpop.f32.mrb[0].mxu0
    %v884 = vadd.f32 %v182, %v883
    %v885 = vpop.f32.mrb[0].mxu0
    %v886 = vadd.f32 %v178, %v885
    %v887 = vpop.f32.mrb[0].mxu0
    %v888 = vadd.f32 %v182, %v887
    %889 = vmatprep.mubr.bf16.mxu0 0
    %890 = vmatmul.mubr.bf16.gmra.mrb[0].mxu0 %v783
    %v891 = vpop.f32.mrb[0].mxu0
    %v892 = vadd.f32 %v178, %v891
    %v893 = vpop.f32.mrb[0].mxu0
    %v894 = vadd.f32 %v182, %v893
    %v895 = vpop.f32.mrb[0].mxu0
    %v896 = vadd.f32 %v178, %v895
    %v897 = vpop.f32.mrb[0].mxu0
    %v898 = vadd.f32 %v182, %v897
    %899 = vmatprep.mubr.bf16.mxu0 0
    %900 = vmatmul.mubr.bf16.gmra.mrb[0].mxu0 %v786
    %v901 = vpop.f32.mrb[0].mxu0
    %v902 = vadd.f32 %v178, %v901
    %v903 = vpop.f32.mrb[0].mxu0
    %v904 = vadd.f32 %v182, %v903
    %v905 = vpop.f32.mrb[0].mxu0
    %v906 = vadd.f32 %v178, %v905
    %v907 = vpop.f32.mrb[0].mxu0
    %v908 = vadd.f32 %v182, %v907
    %909 = vdwg.mxu0
    %910 = vmatprep.subr.bf16.mxu0 %v570
    %911 = vmatpush1.bf16.msra.mxu0 %v569
    %912 = vmatprep.subr.bf16.mxu0 %v586
    %913 = vmatpush1.bf16.msra.mxu0 %v585
    %914 = vmatprep.subr.bf16.mxu0 %v602
    %915 = vmatpush1.bf16.msra.mxu0 %v601
    %916 = vmatprep.subr.bf16.mxu0 %v618
    %917 = vmatpush1.bf16.msra.mxu0 %v617
    %918 = vmatprep.subr.bf16.mxu0 %v634
    %919 = vmatpush1.bf16.msra.mxu0 %v633
    %920 = vmatprep.subr.bf16.mxu0 %v650
    %921 = vmatpush1.bf16.msra.mxu0 %v649
    %922 = vmatprep.subr.bf16.mxu0 %v799
    %923 = vmatpush1.bf16.msra.mxu0 %v796
    %924 = vmatprep.subr.bf16.mxu0 0
    %925 = vmatpush1.bf16.msra.mxu0 0
    %926 = vmatprep.subr.bf16.mxu0 0
    %927 = vmatpush1.bf16.msra.mxu0 0
    %928 = vmatprep.subr.bf16.mxu0 0
    %929 = vmatpush1.bf16.msra.mxu0 0
    %930 = vmatprep.subr.bf16.mxu0 0
    %931 = vmatpush1.bf16.msra.mxu0 0
    %932 = vmatprep.subr.bf16.mxu0 0
    %933 = vmatpush1.bf16.msra.mxu0 0
    %934 = vmatprep.subr.bf16.mxu0 0
    %935 = vmatpush1.bf16.msra.mxu0 0
    %936 = vmatprep.subr.bf16.mxu0 0
    %937 = vmatpush1.bf16.msra.mxu0 0
    %938 = vmatprep.subr.bf16.mxu0 0
    %939 = vmatpush1.bf16.msra.mxu0 0
    %940 = vmatprep.subr.bf16.mxu0 0
    %941 = vmatpush1.bf16.msra.mxu0 0
    %942 = vmatprep.mubr.bf16.mxu0 0
    %943 = vmatmul.mubr.bf16.gmra.mrb[0].mxu0 %v777
    %v944 = vpop.f32.mrb[0].mxu0
    %v945 = vadd.f32 %v186, %v944
    %v946 = vpop.f32.mrb[0].mxu0
    %v947 = vadd.f32 %v190, %v946
    %v948 = vpop.f32.mrb[0].mxu0
    %v949 = vadd.f32 %v186, %v948
    %v950 = vpop.f32.mrb[0].mxu0
    %v951 = vadd.f32 %v190, %v950
    %952 = vmatprep.mubr.bf16.mxu0 0
    %953 = vmatmul.mubr.bf16.gmra.mrb[0].mxu0 %v780
    %v954 = vpop.f32.mrb[0].mxu0
    %v955 = vadd.f32 %v186, %v954
    %v956 = vpop.f32.mrb[0].mxu0
    %v957 = vadd.f32 %v190, %v956
    %v958 = vpop.f32.mrb[0].mxu0
    %v959 = vadd.f32 %v186, %v958
    %v960 = vpop.f32.mrb[0].mxu0
    %v961 = vadd.f32 %v190, %v960
    %962 = vmatprep.mubr.bf16.mxu0 0
    %963 = vmatmul.mubr.bf16.gmra.mrb[0].mxu0 %v783
    %v964 = vpop.f32.mrb[0].mxu0
    %v965 = vadd.f32 %v186, %v964
    %v966 = vpop.f32.mrb[0].mxu0
    %v967 = vadd.f32 %v190, %v966
    %v968 = vpop.f32.mrb[0].mxu0
    %v969 = vadd.f32 %v186, %v968
    %v970 = vpop.f32.mrb[0].mxu0
    %v971 = vadd.f32 %v190, %v970
    %972 = vmatprep.mubr.bf16.mxu0 0
    %973 = vmatmul.mubr.bf16.gmra.mrb[0].mxu0 %v786
    %v974 = vpop.f32.mrb[0].mxu0
    %v975 = vadd.f32 %v186, %v974
    %v976 = vpop.f32.mrb[0].mxu0
    %v977 = vadd.f32 %v190, %v976
    %v978 = vpop.f32.mrb[0].mxu0
    %v979 = vadd.f32 %v186, %v978
    %v980 = vpop.f32.mrb[0].mxu0
    %v981 = vadd.f32 %v190, %v980
    %982 = vdwg.mxu0
    %983 = vmatprep.subr.bf16.mxu0 %v572
    %984 = vmatpush1.bf16.msra.mxu0 %v571
    %985 = vmatprep.subr.bf16.mxu0 %v588
    %986 = vmatpush1.bf16.msra.mxu0 %v587
    %987 = vmatprep.subr.bf16.mxu0 %v604
    %988 = vmatpush1.bf16.msra.mxu0 %v603
    %989 = vmatprep.subr.bf16.mxu0 %v620
    %990 = vmatpush1.bf16.msra.mxu0 %v619
    %991 = vmatprep.subr.bf16.mxu0 %v636
    %992 = vmatpush1.bf16.msra.mxu0 %v635
    %993 = vmatprep.subr.bf16.mxu0 %v652
    %994 = vmatpush1.bf16.msra.mxu0 %v651
    %995 = vmatprep.subr.bf16.mxu0 %v805
    %996 = vmatpush1.bf16.msra.mxu0 %v802
    %997 = vmatprep.subr.bf16.mxu0 0
    %998 = vmatpush1.bf16.msra.mxu0 0
    %999 = vmatprep.subr.bf16.mxu0 0
    %1000 = vmatpush1.bf16.msra.mxu0 0
    %1001 = vmatprep.subr.bf16.mxu0 0
    %1002 = vmatpush1.bf16.msra.mxu0 0
    %1003 = vmatprep.subr.bf16.mxu0 0
    %1004 = vmatpush1.bf16.msra.mxu0 0
    %1005 = vmatprep.subr.bf16.mxu0 0
    %1006 = vmatpush1.bf16.msra.mxu0 0
    %1007 = vmatprep.subr.bf16.mxu0 0
    %1008 = vmatpush1.bf16.msra.mxu0 0
    %1009 = vmatprep.subr.bf16.mxu0 0
    %1010 = vmatpush1.bf16.msra.mxu0 0
    %1011 = vmatprep.subr.bf16.mxu0 0
    %1012 = vmatpush1.bf16.msra.mxu0 0
    %1013 = vmatprep.subr.bf16.mxu0 0
    %1014 = vmatpush1.bf16.msra.mxu0 0
    %1015 = vmatprep.mubr.bf16.mxu0 0
    %1016 = vmatmul.mubr.bf16.gmra.mrb[0].mxu0 %v777
    %v1017 = vpop.f32.mrb[0].mxu0
    %v1018 = vadd.f32 %v194, %v1017
    %v1019 = vpop.f32.mrb[0].mxu0
    %v1020 = vadd.f32 %v198, %v1019
    %v1021 = vpop.f32.mrb[0].mxu0
    %v1022 = vadd.f32 %v194, %v1021
    %v1023 = vpop.f32.mrb[0].mxu0
    %v1024 = vadd.f32 %v198, %v1023
    %1025 = vmatprep.mubr.bf16.mxu0 0
    %1026 = vmatmul.mubr.bf16.gmra.mrb[0].mxu0 %v780
    %v1027 = vpop.f32.mrb[0].mxu0
    %v1028 = vadd.f32 %v194, %v1027
    %v1029 = vpop.f32.mrb[0].mxu0
    %v1030 = vadd.f32 %v198, %v1029
    %v1031 = vpop.f32.mrb[0].mxu0
    %v1032 = vadd.f32 %v194, %v1031
    %v1033 = vpop.f32.mrb[0].mxu0
    %v1034 = vadd.f32 %v198, %v1033
    %1035 = vmatprep.mubr.bf16.mxu0 0
    %1036 = vmatmul.mubr.bf16.gmra.mrb[0].mxu0 %v783
    %v1037 = vpop.f32.mrb[0].mxu0
    %v1038 = vadd.f32 %v194, %v1037
    %v1039 = vpop.f32.mrb[0].mxu0
    %v1040 = vadd.f32 %v198, %v1039
    %v1041 = vpop.f32.mrb[0].mxu0
    %v1042 = vadd.f32 %v194, %v1041
    %v1043 = vpop.f32.mrb[0].mxu0
    %v1044 = vadd.f32 %v198, %v1043
    %1045 = vmatprep.mubr.bf16.mxu0 0
    %1046 = vmatmul.mubr.bf16.gmra.mrb[0].mxu0 %v786
    %v1047 = vpop.f32.mrb[0].mxu0
    %v1048 = vadd.f32 %v194, %v1047
    %v1049 = vpop.f32.mrb[0].mxu0
    %v1050 = vadd.f32 %v198, %v1049
    %v1051 = vpop.f32.mrb[0].mxu0
    %v1052 = vadd.f32 %v194, %v1051
    %v1053 = vpop.f32.mrb[0].mxu0
    %v1054 = vadd.f32 %v198, %v1053
    %1055 = vdwg.mxu0
    %1056 = vmatprep.subr.bf16.mxu0 %v574
    %1057 = vmatpush1.bf16.msra.mxu0 %v573
    %1058 = vmatprep.subr.bf16.mxu0 %v590
    %1059 = vmatpush1.bf16.msra.mxu0 %v589
    %1060 = vmatprep.subr.bf16.mxu0 %v606
    %1061 = vmatpush1.bf16.msra.mxu0 %v605
    %1062 = vmatprep.subr.bf16.mxu0 %v622
    %1063 = vmatpush1.bf16.msra.mxu0 %v621
    %1064 = vmatprep.subr.bf16.mxu0 %v638
    %1065 = vmatpush1.bf16.msra.mxu0 %v637
    %1066 = vmatprep.subr.bf16.mxu0 %v654
    %1067 = vmatpush1.bf16.msra.mxu0 %v653
    %1068 = vmatprep.subr.bf16.mxu0 %v811
    %1069 = vmatpush1.bf16.msra.mxu0 %v808
    %1070 = vmatprep.subr.bf16.mxu0 0
    %1071 = vmatpush1.bf16.msra.mxu0 0
    %1072 = vmatprep.subr.bf16.mxu0 0
    %1073 = vmatpush1.bf16.msra.mxu0 0
    %1074 = vmatprep.subr.bf16.mxu0 0
    %1075 = vmatpush1.bf16.msra.mxu0 0
    %1076 = vmatprep.subr.bf16.mxu0 0
    %1077 = vmatpush1.bf16.msra.mxu0 0
    %1078 = vmatprep.subr.bf16.mxu0 0
    %1079 = vmatpush1.bf16.msra.mxu0 0
    %1080 = vmatprep.subr.bf16.mxu0 0
    %1081 = vmatpush1.bf16.msra.mxu0 0
    %1082 = vmatprep.subr.bf16.mxu0 0
    %1083 = vmatpush1.bf16.msra.mxu0 0
    %1084 = vmatprep.subr.bf16.mxu0 0
    %1085 = vmatpush1.bf16.msra.mxu0 0
    %1086 = vmatprep.subr.bf16.mxu0 0
    %1087 = vmatpush1.bf16.msra.mxu0 0
    %1088 = vmatprep.mubr.bf16.mxu0 0
    %1089 = vmatmul.mubr.bf16.gmra.mrb[0].mxu0 %v777
    %v1090 = vpop.f32.mrb[0].mxu0
    %v1091 = vadd.f32 %v202, %v1090
    %v1092 = vpop.f32.mrb[0].mxu0
    %v1093 = vadd.f32 %v206, %v1092
    %v1094 = vpop.f32.mrb[0].mxu0
    %v1095 = vadd.f32 %v202, %v1094
    %v1096 = vpop.f32.mrb[0].mxu0
    %v1097 = vadd.f32 %v206, %v1096
    %1098 = vmatprep.mubr.bf16.mxu0 0
    %1099 = vmatmul.mubr.bf16.gmra.mrb[0].mxu0 %v780
    %v1100 = vpop.f32.mrb[0].mxu0
    %v1101 = vadd.f32 %v202, %v1100
    %v1102 = vpop.f32.mrb[0].mxu0
    %v1103 = vadd.f32 %v206, %v1102
    %v1104 = vpop.f32.mrb[0].mxu0
    %v1105 = vadd.f32 %v202, %v1104
    %v1106 = vpop.f32.mrb[0].mxu0
    %v1107 = vadd.f32 %v206, %v1106
    %1108 = vmatprep.mubr.bf16.mxu0 0
    %1109 = vmatmul.mubr.bf16.gmra.mrb[0].mxu0 %v783
    %v1110 = vpop.f32.mrb[0].mxu0
    %v1111 = vadd.f32 %v202, %v1110
    %v1112 = vpop.f32.mrb[0].mxu0
    %v1113 = vadd.f32 %v206, %v1112
    %v1114 = vpop.f32.mrb[0].mxu0
    %v1115 = vadd.f32 %v202, %v1114
    %v1116 = vpop.f32.mrb[0].mxu0
    %v1117 = vadd.f32 %v206, %v1116
    %1118 = vmatprep.mubr.bf16.mxu0 0
    %1119 = vmatmul.mubr.bf16.gmra.mrb[0].mxu0 %v786
    %v1120 = vpop.f32.mrb[0].mxu0
    %v1121 = vadd.f32 %v202, %v1120
    %v1122 = vpop.f32.mrb[0].mxu0
    %v1123 = vadd.f32 %v206, %v1122
    %v1124 = vpop.f32.mrb[0].mxu0
    %v1125 = vadd.f32 %v202, %v1124
    %v1126 = vpop.f32.mrb[0].mxu0
    %v1127 = vadd.f32 %v206, %v1126
    %1128 = vdwg.mxu0
    %1129 = vmatprep.subr.bf16.mxu0 %v576
    %1130 = vmatpush1.bf16.msra.mxu0 %v575
    %1131 = vmatprep.subr.bf16.mxu0 %v592
    %1132 = vmatpush1.bf16.msra.mxu0 %v591
    %1133 = vmatprep.subr.bf16.mxu0 %v608
    %1134 = vmatpush1.bf16.msra.mxu0 %v607
    %1135 = vmatprep.subr.bf16.mxu0 %v624
    %1136 = vmatpush1.bf16.msra.mxu0 %v623
    %1137 = vmatprep.subr.bf16.mxu0 %v640
    %1138 = vmatpush1.bf16.msra.mxu0 %v639
    %1139 = vmatprep.subr.bf16.mxu0 %v656
    %1140 = vmatpush1.bf16.msra.mxu0 %v655
    %1141 = vmatprep.subr.bf16.mxu0 %v817
    %1142 = vmatpush1.bf16.msra.mxu0 %v814
    %1143 = vmatprep.subr.bf16.mxu0 0
    %1144 = vmatpush1.bf16.msra.mxu0 0
    %1145 = vmatprep.subr.bf16.mxu0 0
    %1146 = vmatpush1.bf16.msra.mxu0 0
    %1147 = vmatprep.subr.bf16.mxu0 0
    %1148 = vmatpush1.bf16.msra.mxu0 0
    %1149 = vmatprep.subr.bf16.mxu0 0
    %1150 = vmatpush1.bf16.msra.mxu0 0
    %1151 = vmatprep.subr.bf16.mxu0 0
    %1152 = vmatpush1.bf16.msra.mxu0 0
    %1153 = vmatprep.subr.bf16.mxu0 0
    %1154 = vmatpush1.bf16.msra.mxu0 0
    %1155 = vmatprep.subr.bf16.mxu0 0
    %1156 = vmatpush1.bf16.msra.mxu0 0
    %1157 = vmatprep.subr.bf16.mxu0 0
    %1158 = vmatpush1.bf16.msra.mxu0 0
    %1159 = vmatprep.subr.bf16.mxu0 0
    %1160 = vmatpush1.bf16.msra.mxu0 0
    %1161 = vmatprep.mubr.bf16.mxu0 0
    %1162 = vmatmul.mubr.bf16.gmra.mrb[0].mxu0 %v777
    %v1163 = vpop.f32.mrb[0].mxu0
    %v1164 = vadd.f32 %v210, %v1163
    %v1165 = vpop.f32.mrb[0].mxu0
    %v1166 = vadd.f32 %v214, %v1165
    %v1167 = vpop.f32.mrb[0].mxu0
    %v1168 = vadd.f32 %v210, %v1167
    %v1169 = vpop.f32.mrb[0].mxu0
    %v1170 = vadd.f32 %v214, %v1169
    %1171 = vmatprep.mubr.bf16.mxu0 0
    %1172 = vmatmul.mubr.bf16.gmra.mrb[0].mxu0 %v780
    %v1173 = vpop.f32.mrb[0].mxu0
    %v1174 = vadd.f32 %v210, %v1173
    %v1175 = vpop.f32.mrb[0].mxu0
    %v1176 = vadd.f32 %v214, %v1175
    %v1177 = vpop.f32.mrb[0].mxu0
    %v1178 = vadd.f32 %v210, %v1177
    %v1179 = vpop.f32.mrb[0].mxu0
    %v1180 = vadd.f32 %v214, %v1179
    %1181 = vmatprep.mubr.bf16.mxu0 0
    %1182 = vmatmul.mubr.bf16.gmra.mrb[0].mxu0 %v783
    %v1183 = vpop.f32.mrb[0].mxu0
    %v1184 = vadd.f32 %v210, %v1183
    %v1185 = vpop.f32.mrb[0].mxu0
    %v1186 = vadd.f32 %v214, %v1185
    %v1187 = vpop.f32.mrb[0].mxu0
    %v1188 = vadd.f32 %v210, %v1187
    %v1189 = vpop.f32.mrb[0].mxu0
    %v1190 = vadd.f32 %v214, %v1189
    %1191 = vmatprep.mubr.bf16.mxu0 0
    %1192 = vmatmul.mubr.bf16.gmra.mrb[0].mxu0 %v786
    %v1193 = vpop.f32.mrb[0].mxu0
    %v1194 = vadd.f32 %v210, %v1193
    %v1195 = vpop.f32.mrb[0].mxu0
    %v1196 = vadd.f32 %v214, %v1195
    %v1197 = vpop.f32.mrb[0].mxu0
    %v1198 = vadd.f32 %v210, %v1197
    %v1199 = vpop.f32.mrb[0].mxu0
    %v1200 = vadd.f32 %v214, %v1199
    %1201 = vdwg.mxu0
    %1202 = vmatprep.subr.bf16.mxu0 %v578
    %1203 = vmatpush1.bf16.msra.mxu0 %v577
    %1204 = vmatprep.subr.bf16.mxu0 %v594
    %1205 = vmatpush1.bf16.msra.mxu0 %v593
    %1206 = vmatprep.subr.bf16.mxu0 %v610
    %1207 = vmatpush1.bf16.msra.mxu0 %v609
    %1208 = vmatprep.subr.bf16.mxu0 %v626
    %1209 = vmatpush1.bf16.msra.mxu0 %v625
    %1210 = vmatprep.subr.bf16.mxu0 %v642
    %1211 = vmatpush1.bf16.msra.mxu0 %v641
    %1212 = vmatprep.subr.bf16.mxu0 %v658
    %1213 = vmatpush1.bf16.msra.mxu0 %v657
    %1214 = vmatprep.subr.bf16.mxu0 %v823
    %1215 = vmatpush1.bf16.msra.mxu0 %v820
    %1216 = vmatprep.subr.bf16.mxu0 0
    %1217 = vmatpush1.bf16.msra.mxu0 0
    %1218 = vmatprep.subr.bf16.mxu0 0
    %1219 = vmatpush1.bf16.msra.mxu0 0
    %1220 = vmatprep.subr.bf16.mxu0 0
    %1221 = vmatpush1.bf16.msra.mxu0 0
    %1222 = vmatprep.subr.bf16.mxu0 0
    %1223 = vmatpush1.bf16.msra.mxu0 0
    %1224 = vmatprep.subr.bf16.mxu0 0
    %1225 = vmatpush1.bf16.msra.mxu0 0
    %1226 = vmatprep.subr.bf16.mxu0 0
    %1227 = vmatpush1.bf16.msra.mxu0 0
    %1228 = vmatprep.subr.bf16.mxu0 0
    %1229 = vmatpush1.bf16.msra.mxu0 0
    %1230 = vmatprep.subr.bf16.mxu0 0
    %1231 = vmatpush1.bf16.msra.mxu0 0
    %1232 = vmatprep.subr.bf16.mxu0 0
    %1233 = vmatpush1.bf16.msra.mxu0 0
    %1234 = vmatprep.mubr.bf16.mxu0 0
    %1235 = vmatmul.mubr.bf16.gmra.mrb[0].mxu0 %v777
    %v1236 = vpop.f32.mrb[0].mxu0
    %v1237 = vadd.f32 %v218, %v1236
    %v1238 = vpop.f32.mrb[0].mxu0
    %v1239 = vadd.f32 %v222, %v1238
    %v1240 = vpop.f32.mrb[0].mxu0
    %v1241 = vadd.f32 %v218, %v1240
    %v1242 = vpop.f32.mrb[0].mxu0
    %v1243 = vadd.f32 %v222, %v1242
    %1244 = vmatprep.mubr.bf16.mxu0 0
    %1245 = vmatmul.mubr.bf16.gmra.mrb[0].mxu0 %v780
    %v1246 = vpop.f32.mrb[0].mxu0
    %v1247 = vadd.f32 %v218, %v1246
    %v1248 = vpop.f32.mrb[0].mxu0
    %v1249 = vadd.f32 %v222, %v1248
    %v1250 = vpop.f32.mrb[0].mxu0
    %v1251 = vadd.f32 %v218, %v1250
    %v1252 = vpop.f32.mrb[0].mxu0
    %v1253 = vadd.f32 %v222, %v1252
    %1254 = vmatprep.mubr.bf16.mxu0 0
    %1255 = vmatmul.mubr.bf16.gmra.mrb[0].mxu0 %v783
    %v1256 = vpop.f32.mrb[0].mxu0
    %v1257 = vadd.f32 %v218, %v1256
    %v1258 = vpop.f32.mrb[0].mxu0
    %v1259 = vadd.f32 %v222, %v1258
    %v1260 = vpop.f32.mrb[0].mxu0
    %v1261 = vadd.f32 %v218, %v1260
    %v1262 = vpop.f32.mrb[0].mxu0
    %v1263 = vadd.f32 %v222, %v1262
    %1264 = vmatprep.mubr.bf16.mxu0 0
    %1265 = vmatmul.mubr.bf16.gmra.mrb[0].mxu0 %v786
    %v1266 = vpop.f32.mrb[0].mxu0
    %v1267 = vadd.f32 %v218, %v1266
    %v1268 = vpop.f32.mrb[0].mxu0
    %v1269 = vadd.f32 %v222, %v1268
    %v1270 = vpop.f32.mrb[0].mxu0
    %v1271 = vadd.f32 %v218, %v1270
    %v1272 = vpop.f32.mrb[0].mxu0
    %v1273 = vadd.f32 %v222, %v1272
    %1274 = vdwg.mxu0
    %1275 = vmatprep.subr.bf16.mxu0 %v580
    %1276 = vmatpush1.bf16.msra.mxu0 %v579
    %1277 = vmatprep.subr.bf16.mxu0 %v596
    %1278 = vmatpush1.bf16.msra.mxu0 %v595
    %1279 = vmatprep.subr.bf16.mxu0 %v612
    %1280 = vmatpush1.bf16.msra.mxu0 %v611
    %1281 = vmatprep.subr.bf16.mxu0 %v628
    %1282 = vmatpush1.bf16.msra.mxu0 %v627
    %1283 = vmatprep.subr.bf16.mxu0 %v644
    %1284 = vmatpush1.bf16.msra.mxu0 %v643
    %1285 = vmatprep.subr.bf16.mxu0 %v660
    %1286 = vmatpush1.bf16.msra.mxu0 %v659
    %1287 = vmatprep.subr.bf16.mxu0 %v829
    %1288 = vmatpush1.bf16.msra.mxu0 %v826
    %1289 = vmatprep.subr.bf16.mxu0 0
    %1290 = vmatpush1.bf16.msra.mxu0 0
    %1291 = vmatprep.subr.bf16.mxu0 0
    %1292 = vmatpush1.bf16.msra.mxu0 0
    %1293 = vmatprep.subr.bf16.mxu0 0
    %1294 = vmatpush1.bf16.msra.mxu0 0
    %1295 = vmatprep.subr.bf16.mxu0 0
    %1296 = vmatpush1.bf16.msra.mxu0 0
    %1297 = vmatprep.subr.bf16.mxu0 0
    %1298 = vmatpush1.bf16.msra.mxu0 0
    %1299 = vmatprep.subr.bf16.mxu0 0
    %1300 = vmatpush1.bf16.msra.mxu0 0
    %1301 = vmatprep.subr.bf16.mxu0 0
    %1302 = vmatpush1.bf16.msra.mxu0 0
    %1303 = vmatprep.subr.bf16.mxu0 0
    %1304 = vmatpush1.bf16.msra.mxu0 0
    %1305 = vmatprep.subr.bf16.mxu0 0
    %1306 = vmatpush1.bf16.msra.mxu0 0
    %1307 = vmatprep.mubr.bf16.mxu0 0
    %1308 = vmatmul.mubr.bf16.gmra.mrb[0].mxu0 %v777
    %v1309 = vpop.f32.mrb[0].mxu0
    %v1310 = vadd.f32 %v226, %v1309
    %v1311 = vpop.f32.mrb[0].mxu0
    %v1312 = vadd.f32 %v230, %v1311
    %v1313 = vpop.f32.mrb[0].mxu0
    %v1314 = vadd.f32 %v226, %v1313
    %v1315 = vpop.f32.mrb[0].mxu0
    %v1316 = vadd.f32 %v230, %v1315
    %1317 = vmatprep.mubr.bf16.mxu0 0
    %1318 = vmatmul.mubr.bf16.gmra.mrb[0].mxu0 %v780
    %v1319 = vpop.f32.mrb[0].mxu0
    %v1320 = vadd.f32 %v226, %v1319
    %v1321 = vpop.f32.mrb[0].mxu0
    %v1322 = vadd.f32 %v230, %v1321
    %v1323 = vpop.f32.mrb[0].mxu0
    %v1324 = vadd.f32 %v226, %v1323
    %v1325 = vpop.f32.mrb[0].mxu0
    %v1326 = vadd.f32 %v230, %v1325
    %1327 = vmatprep.mubr.bf16.mxu0 0
    %1328 = vmatmul.mubr.bf16.gmra.mrb[0].mxu0 %v783
    %v1329 = vpop.f32.mrb[0].mxu0
    %v1330 = vadd.f32 %v226, %v1329
    %v1331 = vpop.f32.mrb[0].mxu0
    %v1332 = vadd.f32 %v230, %v1331
    %v1333 = vpop.f32.mrb[0].mxu0
    %v1334 = vadd.f32 %v226, %v1333
    %v1335 = vpop.f32.mrb[0].mxu0
    %v1336 = vadd.f32 %v230, %v1335
    %1337 = vmatprep.mubr.bf16.mxu0 0
    %1338 = vmatmul.mubr.bf16.gmra.mrb[0].mxu0 %v786
    %v1339 = vpop.f32.mrb[0].mxu0
    %v1340 = vadd.f32 %v226, %v1339
    %v1341 = vpop.f32.mrb[0].mxu0
    %v1342 = vadd.f32 %v230, %v1341
    %v1343 = vpop.f32.mrb[0].mxu0
    %v1344 = vadd.f32 %v226, %v1343
    %v1345 = vpop.f32.mrb[0].mxu0
    %v1346 = vadd.f32 %v230, %v1345
    %1347 = vdwg.mxu0
    %1348 = vmatprep.subr.bf16.mxu0 %v582
    %1349 = vmatpush1.bf16.msra.mxu0 %v581
    %1350 = vmatprep.subr.bf16.mxu0 %v598
    %1351 = vmatpush1.bf16.msra.mxu0 %v597
    %1352 = vmatprep.subr.bf16.mxu0 %v614
    %1353 = vmatpush1.bf16.msra.mxu0 %v613
    %1354 = vmatprep.subr.bf16.mxu0 %v630
    %1355 = vmatpush1.bf16.msra.mxu0 %v629
    %1356 = vmatprep.subr.bf16.mxu0 %v646
    %1357 = vmatpush1.bf16.msra.mxu0 %v645
    %1358 = vmatprep.subr.bf16.mxu0 %v662
    %1359 = vmatpush1.bf16.msra.mxu0 %v661
    %1360 = vmatprep.subr.bf16.mxu0 %v835
    %1361 = vmatpush1.bf16.msra.mxu0 %v832
    %1362 = vmatprep.subr.bf16.mxu0 0
    %1363 = vmatpush1.bf16.msra.mxu0 0
    %1364 = vmatprep.subr.bf16.mxu0 0
    %1365 = vmatpush1.bf16.msra.mxu0 0
    %1366 = vmatprep.subr.bf16.mxu0 0
    %1367 = vmatpush1.bf16.msra.mxu0 0
    %1368 = vmatprep.subr.bf16.mxu0 0
    %1369 = vmatpush1.bf16.msra.mxu0 0
    %1370 = vmatprep.subr.bf16.mxu0 0
    %1371 = vmatpush1.bf16.msra.mxu0 0
    %1372 = vmatprep.subr.bf16.mxu0 0
    %1373 = vmatpush1.bf16.msra.mxu0 0
    %1374 = vmatprep.subr.bf16.mxu0 0
    %1375 = vmatpush1.bf16.msra.mxu0 0
    %1376 = vmatprep.subr.bf16.mxu0 0
    %1377 = vmatpush1.bf16.msra.mxu0 0
    %1378 = vmatprep.subr.bf16.mxu0 0
    %1379 = vmatpush1.bf16.msra.mxu0 0
    %1380 = vmatprep.mubr.bf16.mxu0 0
    %1381 = vmatmul.mubr.bf16.gmra.mrb[0].mxu0 %v777
    %v1382 = vpop.f32.mrb[0].mxu0
    %v1383 = vadd.f32 %v234, %v1382
    %v1384 = vpop.f32.mrb[0].mxu0
    %v1385 = vadd.f32 %v238, %v1384
    %v1386 = vpop.f32.mrb[0].mxu0
    %v1387 = vadd.f32 %v234, %v1386
    %v1388 = vpop.f32.mrb[0].mxu0
    %v1389 = vadd.f32 %v238, %v1388
    %1390 = vmatprep.mubr.bf16.mxu0 0
    %1391 = vmatmul.mubr.bf16.gmra.mrb[0].mxu0 %v780
    %v1392 = vpop.f32.mrb[0].mxu0
    %v1393 = vadd.f32 %v234, %v1392
    %v1394 = vpop.f32.mrb[0].mxu0
    %v1395 = vadd.f32 %v238, %v1394
    %v1396 = vpop.f32.mrb[0].mxu0
    %v1397 = vadd.f32 %v234, %v1396
    %v1398 = vpop.f32.mrb[0].mxu0
    %v1399 = vadd.f32 %v238, %v1398
    %1400 = vmatprep.mubr.bf16.mxu0 0
    %1401 = vmatmul.mubr.bf16.gmra.mrb[0].mxu0 %v783
    %v1402 = vpop.f32.mrb[0].mxu0
    %v1403 = vadd.f32 %v234, %v1402
    %v1404 = vpop.f32.mrb[0].mxu0
    %v1405 = vadd.f32 %v238, %v1404
    %v1406 = vpop.f32.mrb[0].mxu0
    %v1407 = vadd.f32 %v234, %v1406
    %v1408 = vpop.f32.mrb[0].mxu0
    %v1409 = vadd.f32 %v238, %v1408
    %1410 = vmatprep.mubr.bf16.mxu0 0
    %1411 = vmatmul.mubr.bf16.gmra.mrb[0].mxu0 %v786
    %v1412 = vpop.f32.mrb[0].mxu0
    %v1413 = vadd.f32 %v234, %v1412
    %v1414 = vpop.f32.mrb[0].mxu0
    %v1415 = vadd.f32 %v238, %v1414
    %v1416 = vpop.f32.mrb[0].mxu0
    %v1417 = vadd.f32 %v234, %v1416
    %v1418 = vpop.f32.mrb[0].mxu0
    %v1419 = vadd.f32 %v238, %v1418
    %1420 = vdwg.mxu0
    %1421 = vst [vmem:[#allocation8] sm:$0xff] %v872
    %1422 = vst [vmem:[#allocation8 + $0x8] sm:$0xff] %v874
    %1423 = vst [vmem:[#allocation8 + $0x10] sm:$0xff] %v945
    %1424 = vst [vmem:[#allocation8 + $0x18] sm:$0xff] %v947
    %1425 = vst [vmem:[#allocation8 + $0x20] sm:$0xff] %v1018
    %1426 = vst [vmem:[#allocation8 + $0x28] sm:$0xff] %v1020
    %1427 = vst [vmem:[#allocation8 + $0x30] sm:$0xff] %v1091
    %1428 = vst [vmem:[#allocation8 + $0x38] sm:$0xff] %v1093
    %1429 = vst [vmem:[#allocation8 + $0x40] sm:$0xff] %v1164
    %1430 = vst [vmem:[#allocation8 + $0x48] sm:$0xff] %v1166
    %1431 = vst [vmem:[#allocation8 + $0x50] sm:$0xff] %v1237
    %1432 = vst [vmem:[#allocation8 + $0x58] sm:$0xff] %v1239
    %1433 = vst [vmem:[#allocation8 + $0x60] sm:$0xff] %v1310
    %1434 = vst [vmem:[#allocation8 + $0x68] sm:$0xff] %v1312
    %1435 = vst [vmem:[#allocation8 + $0x70] sm:$0xff] %v1383
    %1436 = vst [vmem:[#allocation8 + $0x78] sm:$0xff] %v1385
    %1437 = vst [vmem:[#allocation8 + $0x80] sm:$0xff] %v876
    %1438 = vst [vmem:[#allocation8 + $0x88] sm:$0xff] %v878
    %1439 = vst [vmem:[#allocation8 + $0x90] sm:$0xff] %v949
    %1440 = vst [vmem:[#allocation8 + $0x98] sm:$0xff] %v951
    %1441 = vst [vmem:[#allocation8 + $0xa0] sm:$0xff] %v1022
    %1442 = vst [vmem:[#allocation8 + $0xa8] sm:$0xff] %v1024
    %1443 = vst [vmem:[#allocation8 + $0xb0] sm:$0xff] %v1095
    %1444 = vst [vmem:[#allocation8 + $0xb8] sm:$0xff] %v1097
    %1445 = vst [vmem:[#allocation8 + $0xc0] sm:$0xff] %v1168
    %1446 = vst [vmem:[#allocation8 + $0xc8] sm:$0xff] %v1170
    %1447 = vst [vmem:[#allocation8 + $0xd0] sm:$0xff] %v1241
    %1448 = vst [vmem:[#allocation8 + $0xd8] sm:$0xff] %v1243
    %1449 = vst [vmem:[#allocation8 + $0xe0] sm:$0xff] %v1314
    %1450 = vst [vmem:[#allocation8 + $0xe8] sm:$0xff] %v1316
    %1451 = vst [vmem:[#allocation8 + $0xf0] sm:$0xff] %v1387
    %1452 = vst [vmem:[#allocation8 + $0xf8] sm:$0xff] %v1389
    %1453 = vst [vmem:[#allocation8 + $0x100] sm:$0xff] %v882
    %1454 = vst [vmem:[#allocation8 + $0x108] sm:$0xff] %v884
    %1455 = vst [vmem:[#allocation8 + $0x110] sm:$0xff] %v955
    %1456 = vst [vmem:[#allocation8 + $0x118] sm:$0xff] %v957
    %1457 = vst [vmem:[#allocation8 + $0x120] sm:$0xff] %v1028
    %1458 = vst [vmem:[#allocation8 + $0x128] sm:$0xff] %v1030
    %1459 = vst [vmem:[#allocation8 + $0x130] sm:$0xff] %v1101
    %1460 = vst [vmem:[#allocation8 + $0x138] sm:$0xff] %v1103
    %1461 = vst [vmem:[#allocation8 + $0x140] sm:$0xff] %v1174
    %1462 = vst [vmem:[#allocation8 + $0x148] sm:$0xff] %v1176
    %1463 = vst [vmem:[#allocation8 + $0x150] sm:$0xff] %v1247
    %1464 = vst [vmem:[#allocation8 + $0x158] sm:$0xff] %v1249
    %1465 = vst [vmem:[#allocation8 + $0x160] sm:$0xff] %v1320
    %1466 = vst [vmem:[#allocation8 + $0x168] sm:$0xff] %v1322
    %1467 = vst [vmem:[#allocation8 + $0x170] sm:$0xff] %v1393
    %1468 = vst [vmem:[#allocation8 + $0x178] sm:$0xff] %v1395
    %1469 = vst [vmem:[#allocation8 + $0x180] sm:$0xff] %v886
    %1470 = vst [vmem:[#allocation8 + $0x188] sm:$0xff] %v888
    %1471 = vst [vmem:[#allocation8 + $0x190] sm:$0xff] %v959
    %1472 = vst [vmem:[#allocation8 + $0x198] sm:$0xff] %v961
    %1473 = vst [vmem:[#allocation8 + $0x1a0] sm:$0xff] %v1032
    %1474 = vst [vmem:[#allocation8 + $0x1a8] sm:$0xff] %v1034
    %1475 = vst [vmem:[#allocation8 + $0x1b0] sm:$0xff] %v1105
    %1476 = vst [vmem:[#allocation8 + $0x1b8] sm:$0xff] %v1107
    %1477 = vst [vmem:[#allocation8 + $0x1c0] sm:$0xff] %v1178
    %1478 = vst [vmem:[#allocation8 + $0x1c8] sm:$0xff] %v1180
    %1479 = vst [vmem:[#allocation8 + $0x1d0] sm:$0xff] %v1251
    %1480 = vst [vmem:[#allocation8 + $0x1d8] sm:$0xff] %v1253
    %1481 = vst [vmem:[#allocation8 + $0x1e0] sm:$0xff] %v1324
    %1482 = vst [vmem:[#allocation8 + $0x1e8] sm:$0xff] %v1326
    %1483 = vst [vmem:[#allocation8 + $0x1f0] sm:$0xff] %v1397
    %1484 = vst [vmem:[#allocation8 + $0x1f8] sm:$0xff] %v1399
    %1485 = vst [vmem:[#allocation8 + $0x200] sm:$0xff] %v892
    %1486 = vst [vmem:[#allocation8 + $0x208] sm:$0xff] %v894
    %1487 = vst [vmem:[#allocation8 + $0x210] sm:$0xff] %v965
    %1488 = vst [vmem:[#allocation8 + $0x218] sm:$0xff] %v967
    %1489 = vst [vmem:[#allocation8 + $0x220] sm:$0xff] %v1038
    %1490 = vst [vmem:[#allocation8 + $0x228] sm:$0xff] %v1040
    %1491 = vst [vmem:[#allocation8 + $0x230] sm:$0xff] %v1111
    %1492 = vst [vmem:[#allocation8 + $0x238] sm:$0xff] %v1113
    %1493 = vst [vmem:[#allocation8 + $0x240] sm:$0xff] %v1184
    %1494 = vst [vmem:[#allocation8 + $0x248] sm:$0xff] %v1186
    %1495 = vst [vmem:[#allocation8 + $0x250] sm:$0xff] %v1257
    %1496 = vst [vmem:[#allocation8 + $0x258] sm:$0xff] %v1259
    %1497 = vst [vmem:[#allocation8 + $0x260] sm:$0xff] %v1330
    %1498 = vst [vmem:[#allocation8 + $0x268] sm:$0xff] %v1332
    %1499 = vst [vmem:[#allocation8 + $0x270] sm:$0xff] %v1403
    %1500 = vst [vmem:[#allocation8 + $0x278] sm:$0xff] %v1405
    %1501 = vst [vmem:[#allocation8 + $0x280] sm:$0xff] %v896
    %1502 = vst [vmem:[#allocation8 + $0x288] sm:$0xff] %v898
    %1503 = vst [vmem:[#allocation8 + $0x290] sm:$0xff] %v969
    %1504 = vst [vmem:[#allocation8 + $0x298] sm:$0xff] %v971
    %1505 = vst [vmem:[#allocation8 + $0x2a0] sm:$0xff] %v1042
    %1506 = vst [vmem:[#allocation8 + $0x2a8] sm:$0xff] %v1044
    %1507 = vst [vmem:[#allocation8 + $0x2b0] sm:$0xff] %v1115
    %1508 = vst [vmem:[#allocation8 + $0x2b8] sm:$0xff] %v1117
    %1509 = vst [vmem:[#allocation8 + $0x2c0] sm:$0xff] %v1188
    %1510 = vst [vmem:[#allocation8 + $0x2c8] sm:$0xff] %v1190
    %1511 = vst [vmem:[#allocation8 + $0x2d0] sm:$0xff] %v1261
    %1512 = vst [vmem:[#allocation8 + $0x2d8] sm:$0xff] %v1263
    %1513 = vst [vmem:[#allocation8 + $0x2e0] sm:$0xff] %v1334
    %1514 = vst [vmem:[#allocation8 + $0x2e8] sm:$0xff] %v1336
    %1515 = vst [vmem:[#allocation8 + $0x2f0] sm:$0xff] %v1407
    %1516 = vst [vmem:[#allocation8 + $0x2f8] sm:$0xff] %v1409
    %1517 = vst [vmem:[#allocation8 + $0x300] sm:$0xff] %v902
    %1518 = vst [vmem:[#allocation8 + $0x308] sm:$0xff] %v904
    %1519 = vst [vmem:[#allocation8 + $0x310] sm:$0xff] %v975
    %1520 = vst [vmem:[#allocation8 + $0x318] sm:$0xff] %v977
    %1521 = vst [vmem:[#allocation8 + $0x320] sm:$0xff] %v1048
    %1522 = vst [vmem:[#allocation8 + $0x328] sm:$0xff] %v1050
    %1523 = vst [vmem:[#allocation8 + $0x330] sm:$0xff] %v1121
    %1524 = vst [vmem:[#allocation8 + $0x338] sm:$0xff] %v1123
    %1525 = vst [vmem:[#allocation8 + $0x340] sm:$0xff] %v1194
    %1526 = vst [vmem:[#allocation8 + $0x348] sm:$0xff] %v1196
    %1527 = vst [vmem:[#allocation8 + $0x350] sm:$0xff] %v1267
    %1528 = vst [vmem:[#allocation8 + $0x358] sm:$0xff] %v1269
    %1529 = vst [vmem:[#allocation8 + $0x360] sm:$0xff] %v1340
    %1530 = vst [vmem:[#allocation8 + $0x368] sm:$0xff] %v1342
    %1531 = vst [vmem:[#allocation8 + $0x370] sm:$0xff] %v1413
    %1532 = vst [vmem:[#allocation8 + $0x378] sm:$0xff] %v1415
    %1533 = vst [vmem:[#allocation8 + $0x380] sm:$0xff] %v906
    %1534 = vst [vmem:[#allocation8 + $0x388] sm:$0xff] %v908
    %1535 = vst [vmem:[#allocation8 + $0x390] sm:$0xff] %v979
    %1536 = vst [vmem:[#allocation8 + $0x398] sm:$0xff] %v981
    %1537 = vst [vmem:[#allocation8 + $0x3a0] sm:$0xff] %v1052
    %1538 = vst [vmem:[#allocation8 + $0x3a8] sm:$0xff] %v1054
    %1539 = vst [vmem:[#allocation8 + $0x3b0] sm:$0xff] %v1125
    %1540 = vst [vmem:[#allocation8 + $0x3b8] sm:$0xff] %v1127
    %1541 = vst [vmem:[#allocation8 + $0x3c0] sm:$0xff] %v1198
    %1542 = vst [vmem:[#allocation8 + $0x3c8] sm:$0xff] %v1200
    %1543 = vst [vmem:[#allocation8 + $0x3d0] sm:$0xff] %v1271
    %1544 = vst [vmem:[#allocation8 + $0x3d8] sm:$0xff] %v1273
    %1545 = vst [vmem:[#allocation8 + $0x3e0] sm:$0xff] %v1344
    %1546 = vst [vmem:[#allocation8 + $0x3e8] sm:$0xff] %v1346
    %1547 = vst [vmem:[#allocation8 + $0x3f0] sm:$0xff] %v1417
    %1548 = vst [vmem:[#allocation8 + $0x3f8] sm:$0xff] %v1419
    // Predicated region
    $region26: #{tpu_custom_call.1} parent=1 // pred_check
      _
    $region27: #{tpu_custom_call.1} parent=1 // pred_check_branch
      %1550 = sbr.rel (0) target = $region29
    $region28: #{tpu_custom_call.1} parent=1 // pred_region
      %s1552 = ssub.s32 16384, 16384
      %1553 = vsyncadd [#allocation4], %s1552
      %s1554 = sshll.u32 [#allocation8], 4
      %s1555 = int_to_ptr.vmem [resolvable:$true] %s1554
      %1560 = dma.vmem_to_hbm [thread:$0]  %s1555, 16384, %s3, [#allocation4], 2048, 2048, 128
    $region29: #{tpu_custom_call.1} parent=1 // pred_fallthru
      _
    // Predicated region
    $region30: #{tpu_custom_call.1} parent=1 // pred_check
      _
    $region31: #{tpu_custom_call.1} parent=1 // pred_check_branch
      %1562 = sbr.rel (0) target = $region33
    $region32: #{tpu_custom_call.1} parent=1 // pred_region
      %1563 = dma.done [#allocation4], 16384
    $region33: #{tpu_custom_call.1} parent=1 // pred_fallthru
      _
    %1564 = vsyncpa [#allocation3], 1
    %1565 = vsyncpa [#allocation6], 1
    %1566 = vsyncpa [#allocation4], 1

</llo_original>
